<compile_context>
chip_gen: v7x
topology: tpu7x:2x2x1
jax: 0.10.0
libtpu: 0.0.40
codegen_flags: <defaults>
</compile_context>

<pallas_src>
import functools

import numpy as np

import jax
import jax.numpy as jnp
from jax.experimental import pallas as pl
from jax.experimental.pallas import tpu as pltpu


# MXU / inter-layer activation dtype: bf16 halves HBM+VMEM bytes and runs the MXU at
# full rate on v6e/v7x (accumulation stays f32).  Final logits stay f32.
_MXU_DTYPE = jnp.bfloat16
_ACT_DTYPE = jnp.bfloat16
_BN_EPS = 1e-5

# Explicit scoped-VMEM limit: 64 MiB is v7x's physical per-TC VMEM (smallest across
# v5e/v6e/v7x) and vastly exceeds the per-step working set at these shapes.
_VMEM_LIMIT_BYTES = 64 * 1024 * 1024


# ----------------------------------------------------------------------------
# Shared in-kernel helper: masked-rotation im2col slab build
# ----------------------------------------------------------------------------
def _build_im2col(xcol_ref, src, mask_ref, *, dil, D, H, W):
    """Fill the (27*Cin, S) im2col slab from ``src`` (Cin, S).

    Tap (kd,kh,kw) reads voxel (d+dd, h+dh, w+dw); on the flattened spatial axis that
    is a constant lane rotation by (dd*H + dh)*W + dw, and out-of-volume reads are
    zeroed by the precomputed 0/1 mask row (replaces explicit zero padding).  The
    rotation uses pltpu.roll (XLU slot), and taps are written in pairs so each bf16
    store covers full (16, 128) tiles when Cin == 8 (unmasked vst).
    """
    Cin, S = src.shape

    def one_tap(k):
        kd, kh, kw = k // 9, (k // 3) % 3, k % 3
        dd, dh, dw = (kd - 1) * dil, (kh - 1) * dil, (kw - 1) * dil
        off = (dd * H + dh) * W + dw
        if off == 0:                       # center tap: no shift, mask is all ones
            return src
        shifted = pltpu.roll(src, shift=(-off) % S, axis=1)   # XLU lane rotate
        return shifted * mask_ref[k:k + 1, :]

    for k in range(0, 26, 2):              # 13 tap pairs -> full-tile (2*Cin)-row stores
        xcol_ref[k * Cin:(k + 2) * Cin, :] = jnp.concatenate(
            [one_tap(k), one_tap(k + 1)], axis=0)
    xcol_ref[26 * Cin:27 * Cin, :] = one_tap(26)   # odd tap out (single masked store)


# ----------------------------------------------------------------------------
# Kernel 1: conv0 special case (Cin = 1) — VPU masked-shift FMAs, + bias + ReLU
# ----------------------------------------------------------------------------
def _conv0_relu_kernel(x_ref, mask_ref, w_ref, bias_ref, o_ref, *, dil, D, H, W):
    """x_ref (1,1,S) bf16; mask (27,S) bf16; w (Cout,27) f32; bias (Cout,1) f32;
    o_ref (1,Cout,S) bf16.  out = relu(conv0(x) + bias)."""
    S = x_ref.shape[-1]
    Cout = w_ref.shape[0]
    x = x_ref[0].astype(jnp.float32)                 # (1, S) f32

    acc = jnp.zeros((Cout, S), jnp.float32)
    for kd in range(3):
        for kh in range(3):
            for kw in range(3):
                k = (kd * 3 + kh) * 3 + kw
                dd, dh, dw = (kd - 1) * dil, (kh - 1) * dil, (kw - 1) * dil
                off = (dd * H + dh) * W + dw
                if off == 0:
                    tap = x
                else:
                    shifted = pltpu.roll(x, shift=(-off) % S, axis=1)
                    tap = shifted * mask_ref[k:k + 1, :].astype(jnp.float32)
                acc = acc + w_ref[:, k:k + 1] * tap   # (Cout,1)*(1,S) broadcast FMA

    out = jnp.maximum(acc + bias_ref[...], 0.0)
    o_ref[0] = out.astype(o_ref.dtype)


# ----------------------------------------------------------------------------
# Kernel 2: fused ASPP branch  conv1 -> BN1 -> ReLU -> conv2 -> BN2 [+extras] [+ReLU]
# ----------------------------------------------------------------------------
def _aspp_branch_kernel(*refs, dil, n_extra, final_relu, D, H, W):
    """refs (in order):
      x_ref:   (1, C, S)  bf16   branch input (conv0 output)
      mask:    (27, S)    bf16   per-tap boundary masks for this dilation
      w1:      (C, 27*C)  bf16   conv1 weights (tap-major / Cin-minor K)
      s1, b1:  (C, 1)     f32    folded BN1 scale / shift
      w2:      (C, 27*C)  bf16   conv2 weights
      s2, b2:  (C, 1)     f32    folded BN2 scale / shift
      extras:  n_extra x (1, C, S) bf16   fused addends (running branch sum, x0)
      o_ref:   (1, C, S)  bf16   output
      xcol:    (27*C, S)  bf16   VMEM scratch (im2col slab, reused for both convs)
      t:       (C, S)     bf16   VMEM scratch (intermediate relu(bn1(conv1(x))))
    """
    (x_ref, mask_ref, w1_ref, s1_ref, b1_ref, w2_ref, s2_ref, b2_ref) = refs[:8]
    extra_refs = refs[8:8 + n_extra]
    o_ref = refs[8 + n_extra]
    xcol_ref = refs[9 + n_extra]
    t_ref = refs[10 + n_extra]

    # conv1 + BN1 + ReLU -> intermediate stays in VMEM (no HBM round trip)
    _build_im2col(xcol_ref, x_ref[0], mask_ref, dil=dil, D=D, H=H, W=W)
    t = jnp.dot(w1_ref[...], xcol_ref[...], preferred_element_type=jnp.float32)
    t = jnp.maximum(t * s1_ref[...] + b1_ref[...], 0.0)
    t_ref[...] = t.astype(t_ref.dtype)

    # conv2 + BN2 (+ running branch sum / residual) (+ final ReLU)
    _build_im2col(xcol_ref, t_ref[...], mask_ref, dil=dil, D=D, H=H, W=W)
    out = jnp.dot(w2_ref[...], xcol_ref[...], preferred_element_type=jnp.float32)
    out = out * s2_ref[...] + b2_ref[...]
    for e_ref in extra_refs:
        out = out + e_ref[0].astype(jnp.float32)
    if final_relu:
        out = jnp.maximum(out, 0.0)
    o_ref[0] = out.astype(o_ref.dtype)


# ----------------------------------------------------------------------------
# Kernel 3: generic fused conv (used for conv_classes): im2col + MXU + scale/shift
# ----------------------------------------------------------------------------
def _conv_kernel(x_ref, mask_ref, w_ref, scale_ref, shift_ref, o_ref, xcol_ref,
                 *, dil, relu, D, H, W):
    _build_im2col(xcol_ref, x_ref[0], mask_ref, dil=dil, D=D, H=H, W=W)
    out = jnp.dot(w_ref[...], xcol_ref[...], preferred_element_type=jnp.float32)
    out = out * scale_ref[...] + shift_ref[...]
    if relu:
        out = jnp.maximum(out, 0.0)
    o_ref[0] = out.astype(o_ref.dtype)


# ----------------------------------------------------------------------------
# Host-side helpers
# ----------------------------------------------------------------------------
@functools.lru_cache(maxsize=None)
def _tap_masks_np(D, H, W, dil):
    """(27, S) 0/1 boundary masks, one row per conv tap (host-precomputed)."""
    S = D * H * W
    s = np.arange(S)
    d_pos, h_pos, w_pos = s // (H * W), (s // W) % H, s % W
    rows = []
    for kd in range(3):
        for kh in range(3):
            for kw in range(3):
                dd, dh, dw = (kd - 1) * dil, (kh - 1) * dil, (kw - 1) * dil
                ok = ((d_pos + dd >= 0) & (d_pos + dd < D) &
                      (h_pos + dh >= 0) & (h_pos + dh < H) &
                      (w_pos + dw >= 0) & (w_pos + dw < W))
                rows.append(ok)
    return np.stack(rows).astype(np.float32)


def _bn_fold(bn):
    scale = bn["gamma"] / jnp.sqrt(bn["var"] + _BN_EPS)
    shift = bn["beta"] - bn["mean"] * scale
    return scale, shift


def _compiler_params():
    return pltpu.CompilerParams(dimension_semantics=("parallel",),
                                vmem_limit_bytes=_VMEM_LIMIT_BYTES)


# ----------------------------------------------------------------------------
# pallas_call wrappers
# ----------------------------------------------------------------------------
def conv0_relu(x, w, bias, *, spatial):
    """relu(Conv3d(1 -> planes, k=3, pad=1)(x) + bias); x: (B, 1, S) bf16."""
    B, _, S = x.shape
    D, H, W = spatial
    Cout = w.shape[-1]
    w2 = w.reshape(27, Cout).T.astype(jnp.float32)          # (Cout, 27), tap-major
    mask = jnp.asarray(_tap_masks_np(D, H, W, 1), dtype=_MXU_DTYPE)
    bias2 = bias.reshape(Cout, 1).astype(jnp.float32)

    kernel = functools.partial(_conv0_relu_kernel, dil=1, D=D, H=H, W=W)
    return pl.pallas_call(
        kernel,
        out_shape=jax.ShapeDtypeStruct((B, Cout, S), _ACT_DTYPE),
        grid=(B,),
        in_specs=[pl.BlockSpec((1, 1, S), lambda b: (b, 0, 0)),
                  pl.BlockSpec((27, S), lambda b: (0, 0)),
                  pl.BlockSpec((Cout, 27), lambda b: (0, 0)),
                  pl.BlockSpec((Cout, 1), lambda b: (0, 0))],
        out_specs=pl.BlockSpec((1, Cout, S), lambda b: (b, 0, 0)),
        compiler_params=_compiler_params(),
    )(x, mask, w2, bias2)


def aspp_branch(x0, w1, bn1, w2, bn2, *, spatial, dilation, extras=(),
                final_relu=False, alias_extra0=False):
    """Fused bn2(conv2(relu(bn1(conv1(x0))))) [+ extras] [ReLU]; all (B, C, S) bf16.

    If alias_extra0, extras[0]'s HBM buffer is reused for the output (it is the
    running ASPP branch sum, dead after this call)."""
    B, C, S = x0.shape
    D, H, W = spatial
    K = 27 * C
    w1m = w1.reshape(K, C).T.astype(_MXU_DTYPE)
    w2m = w2.reshape(K, C).T.astype(_MXU_DTYPE)
    s1, b1 = _bn_fold(bn1)
    s2, b2 = _bn_fold(bn2)
    mask = jnp.asarray(_tap_masks_np(D, H, W, dilation), dtype=_MXU_DTYPE)

    kernel = functools.partial(_aspp_branch_kernel, dil=dilation,
                               n_extra=len(extras), final_relu=final_relu,
                               D=D, H=H, W=W)
    in_specs = [
        pl.BlockSpec((1, C, S), lambda b: (b, 0, 0)),
        pl.BlockSpec((27, S), lambda b: (0, 0)),
        pl.BlockSpec((C, K), lambda b: (0, 0)),
        pl.BlockSpec((C, 1), lambda b: (0, 0)),
        pl.BlockSpec((C, 1), lambda b: (0, 0)),
        pl.BlockSpec((C, K), lambda b: (0, 0)),
        pl.BlockSpec((C, 1), lambda b: (0, 0)),
        pl.BlockSpec((C, 1), lambda b: (0, 0)),
    ] + [pl.BlockSpec((1, C, S), lambda b: (b, 0, 0)) for _ in extras]
    io_aliases = {8: 0} if (alias_extra0 and extras) else {}

    return pl.pallas_call(
        kernel,
        out_shape=jax.ShapeDtypeStruct((B, C, S), _ACT_DTYPE),
        grid=(B,),
        in_specs=in_specs,
        out_specs=pl.BlockSpec((1, C, S), lambda b: (b, 0, 0)),
        scratch_shapes=[pltpu.VMEM((K, S), _MXU_DTYPE),     # im2col slab (reused)
                        pltpu.VMEM((C, S), _MXU_DTYPE)],    # branch intermediate t
        input_output_aliases=io_aliases,
        compiler_params=_compiler_params(),
    )(x0, mask, w1m, s1.reshape(C, 1).astype(jnp.float32),
      b1.reshape(C, 1).astype(jnp.float32), w2m,
      s2.reshape(C, 1).astype(jnp.float32), b2.reshape(C, 1).astype(jnp.float32),
      *extras)


def conv3d(x, w, scale, shift, *, spatial, dilation=1, relu=False,
           out_dtype=jnp.float32):
    """Generic fused Conv3d(3x3x3, pad=dil, dilation=dil) + per-channel scale/shift."""
    B, Cin, S = x.shape
    D, H, W = spatial
    Cout = w.shape[-1]
    K = 27 * Cin
    w2 = w.reshape(K, Cout).T.astype(_MXU_DTYPE)
    mask = jnp.asarray(_tap_masks_np(D, H, W, dilation), dtype=_MXU_DTYPE)

    kernel = functools.partial(_conv_kernel, dil=dilation, relu=relu, D=D, H=H, W=W)
    return pl.pallas_call(
        kernel,
        out_shape=jax.ShapeDtypeStruct((B, Cout, S), out_dtype),
        grid=(B,),
        in_specs=[pl.BlockSpec((1, Cin, S), lambda b: (b, 0, 0)),
                  pl.BlockSpec((27, S), lambda b: (0, 0)),
                  pl.BlockSpec((Cout, K), lambda b: (0, 0)),
                  pl.BlockSpec((Cout, 1), lambda b: (0, 0)),
                  pl.BlockSpec((Cout, 1), lambda b: (0, 0))],
        out_specs=pl.BlockSpec((1, Cout, S), lambda b: (b, 0, 0)),
        scratch_shapes=[pltpu.VMEM((K, S), _MXU_DTYPE)],
        compiler_params=_compiler_params(),
    )(x, mask, w2, scale.reshape(Cout, 1).astype(jnp.float32),
      shift.reshape(Cout, 1).astype(jnp.float32))


# ----------------------------------------------------------------------------
# Parameter init (deterministic, synthetic) and forward pass
# ----------------------------------------------------------------------------
class _KeyGen:
    def __init__(self, key):
        self._key = key

    def __call__(self):
        self._key, sub = jax.random.split(self._key)
        return sub


def init_params(key, planes, nbr_classes, dilations):
    """Synthetic parameters mirroring SegmentationHead (inplanes=1)."""
    keys = _KeyGen(key)

    def conv_w(cin, cout):
        std = 1.0 / np.sqrt(cin * 27)
        return std * jax.random.normal(keys(), (3, 3, 3, cin, cout), jnp.float32)

    def bn_params(c):
        return {
            "gamma": 1.0 + 0.1 * jax.random.normal(keys(), (c,), jnp.float32),
            "beta": 0.1 * jax.random.normal(keys(), (c,), jnp.float32),
            "mean": 0.1 * jax.random.normal(keys(), (c,), jnp.float32),
            "var": jnp.ones((c,), jnp.float32),
        }

    params = {
        "conv0_w": conv_w(1, planes),
        "conv0_b": 0.1 * jax.random.normal(keys(), (planes,), jnp.float32),
        "conv1_w": [], "bn1": [], "conv2_w": [], "bn2": [],
    }
    for _ in dilations:
        params["conv1_w"].append(conv_w(planes, planes))
        params["bn1"].append(bn_params(planes))
        params["conv2_w"].append(conv_w(planes, planes))
        params["bn2"].append(bn_params(planes))
    params["convc_w"] = conv_w(planes, nbr_classes)
    params["convc_b"] = 0.1 * jax.random.normal(keys(), (nbr_classes,), jnp.float32)
    return params


def segmentation_head_forward(x, params, dilations):
    """x: (B, D, H, W) f32 -> (B, nbr_classes, D, H, W) f32 (NCDHW, like PyTorch)."""
    B, D, H, W = x.shape
    S = D * H * W
    spatial = (D, H, W)
    nbr_classes = params["convc_w"].shape[-1]
    # Lane-dense layout requirement.  TODO(synk): pad S to a 128 multiple otherwise.
    assert S % 128 == 0, "flattened spatial size must be a multiple of 128"

    # x_in[:, None] -> single input channel; flatten spatial onto the lane axis.
    # Inter-layer activations live in bf16 in HBM; logits come back in f32.
    x_c = x.reshape(B, 1, S).astype(_ACT_DTYPE)

    # conv0 + bias + ReLU (Cin=1 special case: VPU FMAs, no im2col / MXU)
    x0 = conv0_relu(x_c, params["conv0_w"], params["conv0_b"], spatial=spatial)

    # ASPP branches: y = sum_i bn2_i(conv2_i(relu(bn1_i(conv1_i(x0))))), then
    # relu(y + x0).  Each branch is ONE fused kernel; the running branch sum, the
    # residual and the final ReLU ride the conv2 epilogue of the branch kernels.
    n = len(dilations)
    y = None
    for i, dil in enumerate(dilations):
        last = (i == n - 1)
        extras = () if y is None else (y,)
        if last:
            extras = extras + (x0,)               # fused residual add
        y = aspp_branch(x0, params["conv1_w"][i], params["bn1"][i],
                        params["conv2_w"][i], params["bn2"][i],
                        spatial=spatial, dilation=dil,
                        extras=extras, final_relu=last,
                        alias_extra0=bool(extras))

    # conv_classes (+ bias), f32 logits
    out = conv3d(y, params["convc_w"],
                 jnp.ones((nbr_classes,), jnp.float32), params["convc_b"],
                 spatial=spatial, dilation=1, relu=False, out_dtype=jnp.float32)

    return out.reshape(B, nbr_classes, D, H, W)


# ----------------------------------------------------------------------------
if __name__ == "__main__":
    B, D, H, W = 2, 8, 8, 8
    planes, nbr_classes = 8, 4
    dilations = (1, 2, 3)

    key = jax.random.PRNGKey(0)
    k_x, k_p = jax.random.split(key)
    x = jax.random.normal(k_x, (B, D, H, W), jnp.float32)
    params = init_params(k_p, planes, nbr_classes, dilations)

    out = segmentation_head_forward(x, params, dilations)
    out = jax.block_until_ready(out)

    assert out.shape == (B, nbr_classes, D, H, W), out.shape
    assert bool(jnp.all(jnp.isfinite(out)))
    print("KERNEL_OK")
</pallas_src>

<mosaic_0001>
module attributes {stable_mosaic.version = 11 : i64} {
  func.func @_conv0_relu_kernel(%arg0: i32, %arg1: memref<1x1x512xbf16, #tpu.memory_space<vmem>>, %arg2: memref<27x512xbf16, #tpu.memory_space<vmem>>, %arg3: memref<8x27xf32, #tpu.memory_space<vmem>>, %arg4: memref<8x1xf32, #tpu.memory_space<vmem>>, %arg5: memref<1x8x512xbf16, #tpu.memory_space<vmem>>) attributes {dimension_semantics = [#tpu.dimension_semantics<parallel>], iteration_bounds = array<i64: 2>, scalar_prefetch = 0 : i64, scratch_operands = 0 : i64, tpu.core_type = #tpu.core_type<tc>, window_params = [{transform_indices = @transform_0, window_bounds = array<i64: 1, 1, 512>}, {pipeline_mode = #tpu.pipeline_mode<synchronous>, transform_indices = @transform_1, window_bounds = array<i64: 27, 512>}, {pipeline_mode = #tpu.pipeline_mode<synchronous>, transform_indices = @transform_2, window_bounds = array<i64: 8, 27>}, {pipeline_mode = #tpu.pipeline_mode<synchronous>, transform_indices = @transform_3, window_bounds = array<i64: 8, 1>}, {transform_indices = @transform_4, window_bounds = array<i64: 1, 8, 512>}]} {
    %c0 = arith.constant 0 : index
    %c0_0 = arith.constant 0 : index
    %c0_1 = arith.constant 0 : index
    %0 = vector.load %arg1[%c0, %c0_0, %c0_1] : memref<1x1x512xbf16, #tpu.memory_space<vmem>>, vector<1x1x512xbf16>
    %1 = vector.shape_cast %0 : vector<1x1x512xbf16> to vector<1x512xbf16>
    %2 = arith.extf %1 : vector<1x512xbf16> to vector<1x512xf32>
    %cst = arith.constant 0.000000e+00 : f32
    %3 = vector.broadcast %cst : f32 to vector<8x512xf32>
    %c73_i32 = arith.constant 73 : i32
    %4 = tpu.dynamic_rotate %2 by %c73_i32 dim 1 : vector<1x512xf32>, i32 -> vector<1x512xf32>
    %c0_2 = arith.constant 0 : index
    %c0_3 = arith.constant 0 : index
    %5 = vector.load %arg2[%c0_2, %c0_3] : memref<27x512xbf16, #tpu.memory_space<vmem>>, vector<1x512xbf16>
    %6 = arith.extf %5 : vector<1x512xbf16> to vector<1x512xf32>
    %7 = arith.mulf %4, %6 : vector<1x512xf32>
    %c0_4 = arith.constant 0 : index
    %c0_5 = arith.constant 0 : index
    %8 = vector.load %arg3[%c0_4, %c0_5] : memref<8x27xf32, #tpu.memory_space<vmem>>, vector<8x1xf32>
    %9 = vector.broadcast %8 : vector<8x1xf32> to vector<8x512xf32>
    %10 = vector.broadcast %7 : vector<1x512xf32> to vector<8x512xf32>
    %11 = arith.mulf %9, %10 : vector<8x512xf32>
    %12 = arith.addf %3, %11 : vector<8x512xf32>
    %c72_i32 = arith.constant 72 : i32
    %13 = tpu.dynamic_rotate %2 by %c72_i32 dim 1 : vector<1x512xf32>, i32 -> vector<1x512xf32>
    %c1 = arith.constant 1 : index
    %c0_6 = arith.constant 0 : index
    %14 = vector.load %arg2[%c1, %c0_6] : memref<27x512xbf16, #tpu.memory_space<vmem>>, vector<1x512xbf16>
    %15 = arith.extf %14 : vector<1x512xbf16> to vector<1x512xf32>
    %16 = arith.mulf %13, %15 : vector<1x512xf32>
    %c0_7 = arith.constant 0 : index
    %c1_8 = arith.constant 1 : index
    %17 = vector.load %arg3[%c0_7, %c1_8] : memref<8x27xf32, #tpu.memory_space<vmem>>, vector<8x1xf32>
    %18 = vector.broadcast %17 : vector<8x1xf32> to vector<8x512xf32>
    %19 = vector.broadcast %16 : vector<1x512xf32> to vector<8x512xf32>
    %20 = arith.mulf %18, %19 : vector<8x512xf32>
    %21 = arith.addf %12, %20 : vector<8x512xf32>
    %c71_i32 = arith.constant 71 : i32
    %22 = tpu.dynamic_rotate %2 by %c71_i32 dim 1 : vector<1x512xf32>, i32 -> vector<1x512xf32>
    %c2 = arith.constant 2 : index
    %c0_9 = arith.constant 0 : index
    %23 = vector.load %arg2[%c2, %c0_9] : memref<27x512xbf16, #tpu.memory_space<vmem>>, vector<1x512xbf16>
    %24 = arith.extf %23 : vector<1x512xbf16> to vector<1x512xf32>
    %25 = arith.mulf %22, %24 : vector<1x512xf32>
    %c0_10 = arith.constant 0 : index
    %c2_11 = arith.constant 2 : index
    %26 = vector.load %arg3[%c0_10, %c2_11] : memref<8x27xf32, #tpu.memory_space<vmem>>, vector<8x1xf32>
    %27 = vector.broadcast %26 : vector<8x1xf32> to vector<8x512xf32>
    %28 = vector.broadcast %25 : vector<1x512xf32> to vector<8x512xf32>
    %29 = arith.mulf %27, %28 : vector<8x512xf32>
    %30 = arith.addf %21, %29 : vector<8x512xf32>
    %c65_i32 = arith.constant 65 : i32
    %31 = tpu.dynamic_rotate %2 by %c65_i32 dim 1 : vector<1x512xf32>, i32 -> vector<1x512xf32>
    %c3 = arith.constant 3 : index
    %c0_12 = arith.constant 0 : index
    %32 = vector.load %arg2[%c3, %c0_12] : memref<27x512xbf16, #tpu.memory_space<vmem>>, vector<1x512xbf16>
    %33 = arith.extf %32 : vector<1x512xbf16> to vector<1x512xf32>
    %34 = arith.mulf %31, %33 : vector<1x512xf32>
    %c0_13 = arith.constant 0 : index
    %c3_14 = arith.constant 3 : index
    %35 = vector.load %arg3[%c0_13, %c3_14] : memref<8x27xf32, #tpu.memory_space<vmem>>, vector<8x1xf32>
    %36 = vector.broadcast %35 : vector<8x1xf32> to vector<8x512xf32>
    %37 = vector.broadcast %34 : vector<1x512xf32> to vector<8x512xf32>
    %38 = arith.mulf %36, %37 : vector<8x512xf32>
    %39 = arith.addf %30, %38 : vector<8x512xf32>
    %c64_i32 = arith.constant 64 : i32
    %40 = tpu.dynamic_rotate %2 by %c64_i32 dim 1 : vector<1x512xf32>, i32 -> vector<1x512xf32>
    %c4 = arith.constant 4 : index
    %c0_15 = arith.constant 0 : index
    %41 = vector.load %arg2[%c4, %c0_15] : memref<27x512xbf16, #tpu.memory_space<vmem>>, vector<1x512xbf16>
    %42 = arith.extf %41 : vector<1x512xbf16> to vector<1x512xf32>
    %43 = arith.mulf %40, %42 : vector<1x512xf32>
    %c0_16 = arith.constant 0 : index
    %c4_17 = arith.constant 4 : index
    %44 = vector.load %arg3[%c0_16, %c4_17] : memref<8x27xf32, #tpu.memory_space<vmem>>, vector<8x1xf32>
    %45 = vector.broadcast %44 : vector<8x1xf32> to vector<8x512xf32>
    %46 = vector.broadcast %43 : vector<1x512xf32> to vector<8x512xf32>
    %47 = arith.mulf %45, %46 : vector<8x512xf32>
    %48 = arith.addf %39, %47 : vector<8x512xf32>
    %c63_i32 = arith.constant 63 : i32
    %49 = tpu.dynamic_rotate %2 by %c63_i32 dim 1 : vector<1x512xf32>, i32 -> vector<1x512xf32>
    %c5 = arith.constant 5 : index
    %c0_18 = arith.constant 0 : index
    %50 = vector.load %arg2[%c5, %c0_18] : memref<27x512xbf16, #tpu.memory_space<vmem>>, vector<1x512xbf16>
    %51 = arith.extf %50 : vector<1x512xbf16> to vector<1x512xf32>
    %52 = arith.mulf %49, %51 : vector<1x512xf32>
    %c0_19 = arith.constant 0 : index
    %c5_20 = arith.constant 5 : index
    %53 = vector.load %arg3[%c0_19, %c5_20] : memref<8x27xf32, #tpu.memory_space<vmem>>, vector<8x1xf32>
    %54 = vector.broadcast %53 : vector<8x1xf32> to vector<8x512xf32>
    %55 = vector.broadcast %52 : vector<1x512xf32> to vector<8x512xf32>
    %56 = arith.mulf %54, %55 : vector<8x512xf32>
    %57 = arith.addf %48, %56 : vector<8x512xf32>
    %c57_i32 = arith.constant 57 : i32
    %58 = tpu.dynamic_rotate %2 by %c57_i32 dim 1 : vector<1x512xf32>, i32 -> vector<1x512xf32>
    %c6 = arith.constant 6 : index
    %c0_21 = arith.constant 0 : index
    %59 = vector.load %arg2[%c6, %c0_21] : memref<27x512xbf16, #tpu.memory_space<vmem>>, vector<1x512xbf16>
    %60 = arith.extf %59 : vector<1x512xbf16> to vector<1x512xf32>
    %61 = arith.mulf %58, %60 : vector<1x512xf32>
    %c0_22 = arith.constant 0 : index
    %c6_23 = arith.constant 6 : index
    %62 = vector.load %arg3[%c0_22, %c6_23] : memref<8x27xf32, #tpu.memory_space<vmem>>, vector<8x1xf32>
    %63 = vector.broadcast %62 : vector<8x1xf32> to vector<8x512xf32>
    %64 = vector.broadcast %61 : vector<1x512xf32> to vector<8x512xf32>
    %65 = arith.mulf %63, %64 : vector<8x512xf32>
    %66 = arith.addf %57, %65 : vector<8x512xf32>
    %c56_i32 = arith.constant 56 : i32
    %67 = tpu.dynamic_rotate %2 by %c56_i32 dim 1 : vector<1x512xf32>, i32 -> vector<1x512xf32>
    %c7 = arith.constant 7 : index
    %c0_24 = arith.constant 0 : index
    %68 = vector.load %arg2[%c7, %c0_24] : memref<27x512xbf16, #tpu.memory_space<vmem>>, vector<1x512xbf16>
    %69 = arith.extf %68 : vector<1x512xbf16> to vector<1x512xf32>
    %70 = arith.mulf %67, %69 : vector<1x512xf32>
    %c0_25 = arith.constant 0 : index
    %c7_26 = arith.constant 7 : index
    %71 = vector.load %arg3[%c0_25, %c7_26] : memref<8x27xf32, #tpu.memory_space<vmem>>, vector<8x1xf32>
    %72 = vector.broadcast %71 : vector<8x1xf32> to vector<8x512xf32>
    %73 = vector.broadcast %70 : vector<1x512xf32> to vector<8x512xf32>
    %74 = arith.mulf %72, %73 : vector<8x512xf32>
    %75 = arith.addf %66, %74 : vector<8x512xf32>
    %c55_i32 = arith.constant 55 : i32
    %76 = tpu.dynamic_rotate %2 by %c55_i32 dim 1 : vector<1x512xf32>, i32 -> vector<1x512xf32>
    %c8 = arith.constant 8 : index
    %c0_27 = arith.constant 0 : index
    %77 = vector.load %arg2[%c8, %c0_27] : memref<27x512xbf16, #tpu.memory_space<vmem>>, vector<1x512xbf16>
    %78 = arith.extf %77 : vector<1x512xbf16> to vector<1x512xf32>
    %79 = arith.mulf %76, %78 : vector<1x512xf32>
    %c0_28 = arith.constant 0 : index
    %c8_29 = arith.constant 8 : index
    %80 = vector.load %arg3[%c0_28, %c8_29] : memref<8x27xf32, #tpu.memory_space<vmem>>, vector<8x1xf32>
    %81 = vector.broadcast %80 : vector<8x1xf32> to vector<8x512xf32>
    %82 = vector.broadcast %79 : vector<1x512xf32> to vector<8x512xf32>
    %83 = arith.mulf %81, %82 : vector<8x512xf32>
    %84 = arith.addf %75, %83 : vector<8x512xf32>
    %c9_i32 = arith.constant 9 : i32
    %85 = tpu.dynamic_rotate %2 by %c9_i32 dim 1 : vector<1x512xf32>, i32 -> vector<1x512xf32>
    %c9 = arith.constant 9 : index
    %c0_30 = arith.constant 0 : index
    %86 = vector.load %arg2[%c9, %c0_30] : memref<27x512xbf16, #tpu.memory_space<vmem>>, vector<1x512xbf16>
    %87 = arith.extf %86 : vector<1x512xbf16> to vector<1x512xf32>
    %88 = arith.mulf %85, %87 : vector<1x512xf32>
    %c0_31 = arith.constant 0 : index
    %c9_32 = arith.constant 9 : index
    %89 = vector.load %arg3[%c0_31, %c9_32] : memref<8x27xf32, #tpu.memory_space<vmem>>, vector<8x1xf32>
    %90 = vector.broadcast %89 : vector<8x1xf32> to vector<8x512xf32>
    %91 = vector.broadcast %88 : vector<1x512xf32> to vector<8x512xf32>
    %92 = arith.mulf %90, %91 : vector<8x512xf32>
    %93 = arith.addf %84, %92 : vector<8x512xf32>
    %c8_i32 = arith.constant 8 : i32
    %94 = tpu.dynamic_rotate %2 by %c8_i32 dim 1 : vector<1x512xf32>, i32 -> vector<1x512xf32>
    %c10 = arith.constant 10 : index
    %c0_33 = arith.constant 0 : index
    %95 = vector.load %arg2[%c10, %c0_33] : memref<27x512xbf16, #tpu.memory_space<vmem>>, vector<1x512xbf16>
    %96 = arith.extf %95 : vector<1x512xbf16> to vector<1x512xf32>
    %97 = arith.mulf %94, %96 : vector<1x512xf32>
    %c0_34 = arith.constant 0 : index
    %c10_35 = arith.constant 10 : index
    %98 = vector.load %arg3[%c0_34, %c10_35] : memref<8x27xf32, #tpu.memory_space<vmem>>, vector<8x1xf32>
    %99 = vector.broadcast %98 : vector<8x1xf32> to vector<8x512xf32>
    %100 = vector.broadcast %97 : vector<1x512xf32> to vector<8x512xf32>
    %101 = arith.mulf %99, %100 : vector<8x512xf32>
    %102 = arith.addf %93, %101 : vector<8x512xf32>
    %c7_i32 = arith.constant 7 : i32
    %103 = tpu.dynamic_rotate %2 by %c7_i32 dim 1 : vector<1x512xf32>, i32 -> vector<1x512xf32>
    %c11 = arith.constant 11 : index
    %c0_36 = arith.constant 0 : index
    %104 = vector.load %arg2[%c11, %c0_36] : memref<27x512xbf16, #tpu.memory_space<vmem>>, vector<1x512xbf16>
    %105 = arith.extf %104 : vector<1x512xbf16> to vector<1x512xf32>
    %106 = arith.mulf %103, %105 : vector<1x512xf32>
    %c0_37 = arith.constant 0 : index
    %c11_38 = arith.constant 11 : index
    %107 = vector.load %arg3[%c0_37, %c11_38] : memref<8x27xf32, #tpu.memory_space<vmem>>, vector<8x1xf32>
    %108 = vector.broadcast %107 : vector<8x1xf32> to vector<8x512xf32>
    %109 = vector.broadcast %106 : vector<1x512xf32> to vector<8x512xf32>
    %110 = arith.mulf %108, %109 : vector<8x512xf32>
    %111 = arith.addf %102, %110 : vector<8x512xf32>
    %c1_i32 = arith.constant 1 : i32
    %112 = tpu.dynamic_rotate %2 by %c1_i32 dim 1 : vector<1x512xf32>, i32 -> vector<1x512xf32>
    %c12 = arith.constant 12 : index
    %c0_39 = arith.constant 0 : index
    %113 = vector.load %arg2[%c12, %c0_39] : memref<27x512xbf16, #tpu.memory_space<vmem>>, vector<1x512xbf16>
    %114 = arith.extf %113 : vector<1x512xbf16> to vector<1x512xf32>
    %115 = arith.mulf %112, %114 : vector<1x512xf32>
    %c0_40 = arith.constant 0 : index
    %c12_41 = arith.constant 12 : index
    %116 = vector.load %arg3[%c0_40, %c12_41] : memref<8x27xf32, #tpu.memory_space<vmem>>, vector<8x1xf32>
    %117 = vector.broadcast %116 : vector<8x1xf32> to vector<8x512xf32>
    %118 = vector.broadcast %115 : vector<1x512xf32> to vector<8x512xf32>
    %119 = arith.mulf %117, %118 : vector<8x512xf32>
    %120 = arith.addf %111, %119 : vector<8x512xf32>
    %c0_42 = arith.constant 0 : index
    %c13 = arith.constant 13 : index
    %121 = vector.load %arg3[%c0_42, %c13] : memref<8x27xf32, #tpu.memory_space<vmem>>, vector<8x1xf32>
    %122 = vector.broadcast %121 : vector<8x1xf32> to vector<8x512xf32>
    %123 = vector.broadcast %2 : vector<1x512xf32> to vector<8x512xf32>
    %124 = arith.mulf %122, %123 : vector<8x512xf32>
    %125 = arith.addf %120, %124 : vector<8x512xf32>
    %c511_i32 = arith.constant 511 : i32
    %126 = tpu.dynamic_rotate %2 by %c511_i32 dim 1 : vector<1x512xf32>, i32 -> vector<1x512xf32>
    %c14 = arith.constant 14 : index
    %c0_43 = arith.constant 0 : index
    %127 = vector.load %arg2[%c14, %c0_43] : memref<27x512xbf16, #tpu.memory_space<vmem>>, vector<1x512xbf16>
    %128 = arith.extf %127 : vector<1x512xbf16> to vector<1x512xf32>
    %129 = arith.mulf %126, %128 : vector<1x512xf32>
    %c0_44 = arith.constant 0 : index
    %c14_45 = arith.constant 14 : index
    %130 = vector.load %arg3[%c0_44, %c14_45] : memref<8x27xf32, #tpu.memory_space<vmem>>, vector<8x1xf32>
    %131 = vector.broadcast %130 : vector<8x1xf32> to vector<8x512xf32>
    %132 = vector.broadcast %129 : vector<1x512xf32> to vector<8x512xf32>
    %133 = arith.mulf %131, %132 : vector<8x512xf32>
    %134 = arith.addf %125, %133 : vector<8x512xf32>
    %c505_i32 = arith.constant 505 : i32
    %135 = tpu.dynamic_rotate %2 by %c505_i32 dim 1 : vector<1x512xf32>, i32 -> vector<1x512xf32>
    %c15 = arith.constant 15 : index
    %c0_46 = arith.constant 0 : index
    %136 = vector.load %arg2[%c15, %c0_46] : memref<27x512xbf16, #tpu.memory_space<vmem>>, vector<1x512xbf16>
    %137 = arith.extf %136 : vector<1x512xbf16> to vector<1x512xf32>
    %138 = arith.mulf %135, %137 : vector<1x512xf32>
    %c0_47 = arith.constant 0 : index
    %c15_48 = arith.constant 15 : index
    %139 = vector.load %arg3[%c0_47, %c15_48] : memref<8x27xf32, #tpu.memory_space<vmem>>, vector<8x1xf32>
    %140 = vector.broadcast %139 : vector<8x1xf32> to vector<8x512xf32>
    %141 = vector.broadcast %138 : vector<1x512xf32> to vector<8x512xf32>
    %142 = arith.mulf %140, %141 : vector<8x512xf32>
    %143 = arith.addf %134, %142 : vector<8x512xf32>
    %c504_i32 = arith.constant 504 : i32
    %144 = tpu.dynamic_rotate %2 by %c504_i32 dim 1 : vector<1x512xf32>, i32 -> vector<1x512xf32>
    %c16 = arith.constant 16 : index
    %c0_49 = arith.constant 0 : index
    %145 = vector.load %arg2[%c16, %c0_49] : memref<27x512xbf16, #tpu.memory_space<vmem>>, vector<1x512xbf16>
    %146 = arith.extf %145 : vector<1x512xbf16> to vector<1x512xf32>
    %147 = arith.mulf %144, %146 : vector<1x512xf32>
    %c0_50 = arith.constant 0 : index
    %c16_51 = arith.constant 16 : index
    %148 = vector.load %arg3[%c0_50, %c16_51] : memref<8x27xf32, #tpu.memory_space<vmem>>, vector<8x1xf32>
    %149 = vector.broadcast %148 : vector<8x1xf32> to vector<8x512xf32>
    %150 = vector.broadcast %147 : vector<1x512xf32> to vector<8x512xf32>
    %151 = arith.mulf %149, %150 : vector<8x512xf32>
    %152 = arith.addf %143, %151 : vector<8x512xf32>
    %c503_i32 = arith.constant 503 : i32
    %153 = tpu.dynamic_rotate %2 by %c503_i32 dim 1 : vector<1x512xf32>, i32 -> vector<1x512xf32>
    %c17 = arith.constant 17 : index
    %c0_52 = arith.constant 0 : index
    %154 = vector.load %arg2[%c17, %c0_52] : memref<27x512xbf16, #tpu.memory_space<vmem>>, vector<1x512xbf16>
    %155 = arith.extf %154 : vector<1x512xbf16> to vector<1x512xf32>
    %156 = arith.mulf %153, %155 : vector<1x512xf32>
    %c0_53 = arith.constant 0 : index
    %c17_54 = arith.constant 17 : index
    %157 = vector.load %arg3[%c0_53, %c17_54] : memref<8x27xf32, #tpu.memory_space<vmem>>, vector<8x1xf32>
    %158 = vector.broadcast %157 : vector<8x1xf32> to vector<8x512xf32>
    %159 = vector.broadcast %156 : vector<1x512xf32> to vector<8x512xf32>
    %160 = arith.mulf %158, %159 : vector<8x512xf32>
    %161 = arith.addf %152, %160 : vector<8x512xf32>
    %c457_i32 = arith.constant 457 : i32
    %162 = tpu.dynamic_rotate %2 by %c457_i32 dim 1 : vector<1x512xf32>, i32 -> vector<1x512xf32>
    %c18 = arith.constant 18 : index
    %c0_55 = arith.constant 0 : index
    %163 = vector.load %arg2[%c18, %c0_55] : memref<27x512xbf16, #tpu.memory_space<vmem>>, vector<1x512xbf16>
    %164 = arith.extf %163 : vector<1x512xbf16> to vector<1x512xf32>
    %165 = arith.mulf %162, %164 : vector<1x512xf32>
    %c0_56 = arith.constant 0 : index
    %c18_57 = arith.constant 18 : index
    %166 = vector.load %arg3[%c0_56, %c18_57] : memref<8x27xf32, #tpu.memory_space<vmem>>, vector<8x1xf32>
    %167 = vector.broadcast %166 : vector<8x1xf32> to vector<8x512xf32>
    %168 = vector.broadcast %165 : vector<1x512xf32> to vector<8x512xf32>
    %169 = arith.mulf %167, %168 : vector<8x512xf32>
    %170 = arith.addf %161, %169 : vector<8x512xf32>
    %c456_i32 = arith.constant 456 : i32
    %171 = tpu.dynamic_rotate %2 by %c456_i32 dim 1 : vector<1x512xf32>, i32 -> vector<1x512xf32>
    %c19 = arith.constant 19 : index
    %c0_58 = arith.constant 0 : index
    %172 = vector.load %arg2[%c19, %c0_58] : memref<27x512xbf16, #tpu.memory_space<vmem>>, vector<1x512xbf16>
    %173 = arith.extf %172 : vector<1x512xbf16> to vector<1x512xf32>
    %174 = arith.mulf %171, %173 : vector<1x512xf32>
    %c0_59 = arith.constant 0 : index
    %c19_60 = arith.constant 19 : index
    %175 = vector.load %arg3[%c0_59, %c19_60] : memref<8x27xf32, #tpu.memory_space<vmem>>, vector<8x1xf32>
    %176 = vector.broadcast %175 : vector<8x1xf32> to vector<8x512xf32>
    %177 = vector.broadcast %174 : vector<1x512xf32> to vector<8x512xf32>
    %178 = arith.mulf %176, %177 : vector<8x512xf32>
    %179 = arith.addf %170, %178 : vector<8x512xf32>
    %c455_i32 = arith.constant 455 : i32
    %180 = tpu.dynamic_rotate %2 by %c455_i32 dim 1 : vector<1x512xf32>, i32 -> vector<1x512xf32>
    %c20 = arith.constant 20 : index
    %c0_61 = arith.constant 0 : index
    %181 = vector.load %arg2[%c20, %c0_61] : memref<27x512xbf16, #tpu.memory_space<vmem>>, vector<1x512xbf16>
    %182 = arith.extf %181 : vector<1x512xbf16> to vector<1x512xf32>
    %183 = arith.mulf %180, %182 : vector<1x512xf32>
    %c0_62 = arith.constant 0 : index
    %c20_63 = arith.constant 20 : index
    %184 = vector.load %arg3[%c0_62, %c20_63] : memref<8x27xf32, #tpu.memory_space<vmem>>, vector<8x1xf32>
    %185 = vector.broadcast %184 : vector<8x1xf32> to vector<8x512xf32>
    %186 = vector.broadcast %183 : vector<1x512xf32> to vector<8x512xf32>
    %187 = arith.mulf %185, %186 : vector<8x512xf32>
    %188 = arith.addf %179, %187 : vector<8x512xf32>
    %c449_i32 = arith.constant 449 : i32
    %189 = tpu.dynamic_rotate %2 by %c449_i32 dim 1 : vector<1x512xf32>, i32 -> vector<1x512xf32>
    %c21 = arith.constant 21 : index
    %c0_64 = arith.constant 0 : index
    %190 = vector.load %arg2[%c21, %c0_64] : memref<27x512xbf16, #tpu.memory_space<vmem>>, vector<1x512xbf16>
    %191 = arith.extf %190 : vector<1x512xbf16> to vector<1x512xf32>
    %192 = arith.mulf %189, %191 : vector<1x512xf32>
    %c0_65 = arith.constant 0 : index
    %c21_66 = arith.constant 21 : index
    %193 = vector.load %arg3[%c0_65, %c21_66] : memref<8x27xf32, #tpu.memory_space<vmem>>, vector<8x1xf32>
    %194 = vector.broadcast %193 : vector<8x1xf32> to vector<8x512xf32>
    %195 = vector.broadcast %192 : vector<1x512xf32> to vector<8x512xf32>
    %196 = arith.mulf %194, %195 : vector<8x512xf32>
    %197 = arith.addf %188, %196 : vector<8x512xf32>
    %c448_i32 = arith.constant 448 : i32
    %198 = tpu.dynamic_rotate %2 by %c448_i32 dim 1 : vector<1x512xf32>, i32 -> vector<1x512xf32>
    %c22 = arith.constant 22 : index
    %c0_67 = arith.constant 0 : index
    %199 = vector.load %arg2[%c22, %c0_67] : memref<27x512xbf16, #tpu.memory_space<vmem>>, vector<1x512xbf16>
    %200 = arith.extf %199 : vector<1x512xbf16> to vector<1x512xf32>
    %201 = arith.mulf %198, %200 : vector<1x512xf32>
    %c0_68 = arith.constant 0 : index
    %c22_69 = arith.constant 22 : index
    %202 = vector.load %arg3[%c0_68, %c22_69] : memref<8x27xf32, #tpu.memory_space<vmem>>, vector<8x1xf32>
    %203 = vector.broadcast %202 : vector<8x1xf32> to vector<8x512xf32>
    %204 = vector.broadcast %201 : vector<1x512xf32> to vector<8x512xf32>
    %205 = arith.mulf %203, %204 : vector<8x512xf32>
    %206 = arith.addf %197, %205 : vector<8x512xf32>
    %c447_i32 = arith.constant 447 : i32
    %207 = tpu.dynamic_rotate %2 by %c447_i32 dim 1 : vector<1x512xf32>, i32 -> vector<1x512xf32>
    %c23 = arith.constant 23 : index
    %c0_70 = arith.constant 0 : index
    %208 = vector.load %arg2[%c23, %c0_70] : memref<27x512xbf16, #tpu.memory_space<vmem>>, vector<1x512xbf16>
    %209 = arith.extf %208 : vector<1x512xbf16> to vector<1x512xf32>
    %210 = arith.mulf %207, %209 : vector<1x512xf32>
    %c0_71 = arith.constant 0 : index
    %c23_72 = arith.constant 23 : index
    %211 = vector.load %arg3[%c0_71, %c23_72] : memref<8x27xf32, #tpu.memory_space<vmem>>, vector<8x1xf32>
    %212 = vector.broadcast %211 : vector<8x1xf32> to vector<8x512xf32>
    %213 = vector.broadcast %210 : vector<1x512xf32> to vector<8x512xf32>
    %214 = arith.mulf %212, %213 : vector<8x512xf32>
    %215 = arith.addf %206, %214 : vector<8x512xf32>
    %c441_i32 = arith.constant 441 : i32
    %216 = tpu.dynamic_rotate %2 by %c441_i32 dim 1 : vector<1x512xf32>, i32 -> vector<1x512xf32>
    %c24 = arith.constant 24 : index
    %c0_73 = arith.constant 0 : index
    %217 = vector.load %arg2[%c24, %c0_73] : memref<27x512xbf16, #tpu.memory_space<vmem>>, vector<1x512xbf16>
    %218 = arith.extf %217 : vector<1x512xbf16> to vector<1x512xf32>
    %219 = arith.mulf %216, %218 : vector<1x512xf32>
    %c0_74 = arith.constant 0 : index
    %c24_75 = arith.constant 24 : index
    %220 = vector.load %arg3[%c0_74, %c24_75] : memref<8x27xf32, #tpu.memory_space<vmem>>, vector<8x1xf32>
    %221 = vector.broadcast %220 : vector<8x1xf32> to vector<8x512xf32>
    %222 = vector.broadcast %219 : vector<1x512xf32> to vector<8x512xf32>
    %223 = arith.mulf %221, %222 : vector<8x512xf32>
    %224 = arith.addf %215, %223 : vector<8x512xf32>
    %c440_i32 = arith.constant 440 : i32
    %225 = tpu.dynamic_rotate %2 by %c440_i32 dim 1 : vector<1x512xf32>, i32 -> vector<1x512xf32>
    %c25 = arith.constant 25 : index
    %c0_76 = arith.constant 0 : index
    %226 = vector.load %arg2[%c25, %c0_76] : memref<27x512xbf16, #tpu.memory_space<vmem>>, vector<1x512xbf16>
    %227 = arith.extf %226 : vector<1x512xbf16> to vector<1x512xf32>
    %228 = arith.mulf %225, %227 : vector<1x512xf32>
    %c0_77 = arith.constant 0 : index
    %c25_78 = arith.constant 25 : index
    %229 = vector.load %arg3[%c0_77, %c25_78] : memref<8x27xf32, #tpu.memory_space<vmem>>, vector<8x1xf32>
    %230 = vector.broadcast %229 : vector<8x1xf32> to vector<8x512xf32>
    %231 = vector.broadcast %228 : vector<1x512xf32> to vector<8x512xf32>
    %232 = arith.mulf %230, %231 : vector<8x512xf32>
    %233 = arith.addf %224, %232 : vector<8x512xf32>
    %c439_i32 = arith.constant 439 : i32
    %234 = tpu.dynamic_rotate %2 by %c439_i32 dim 1 : vector<1x512xf32>, i32 -> vector<1x512xf32>
    %c26 = arith.constant 26 : index
    %c0_79 = arith.constant 0 : index
    %235 = vector.load %arg2[%c26, %c0_79] : memref<27x512xbf16, #tpu.memory_space<vmem>>, vector<1x512xbf16>
    %236 = arith.extf %235 : vector<1x512xbf16> to vector<1x512xf32>
    %237 = arith.mulf %234, %236 : vector<1x512xf32>
    %c0_80 = arith.constant 0 : index
    %c26_81 = arith.constant 26 : index
    %238 = vector.load %arg3[%c0_80, %c26_81] : memref<8x27xf32, #tpu.memory_space<vmem>>, vector<8x1xf32>
    %239 = vector.broadcast %238 : vector<8x1xf32> to vector<8x512xf32>
    %240 = vector.broadcast %237 : vector<1x512xf32> to vector<8x512xf32>
    %241 = arith.mulf %239, %240 : vector<8x512xf32>
    %242 = arith.addf %233, %241 : vector<8x512xf32>
    %c0_82 = arith.constant 0 : index
    %c0_83 = arith.constant 0 : index
    %243 = vector.load %arg4[%c0_82, %c0_83] : memref<8x1xf32, #tpu.memory_space<vmem>>, vector<8x1xf32>
    %244 = vector.broadcast %243 : vector<8x1xf32> to vector<8x512xf32>
    %245 = arith.addf %242, %244 : vector<8x512xf32>
    %cst_84 = arith.constant 0.000000e+00 : f32
    %246 = vector.broadcast %cst_84 : f32 to vector<8x512xf32>
    %247 = arith.maximumf %245, %246 : vector<8x512xf32>
    %248 = arith.truncf %247 : vector<8x512xf32> to vector<8x512xbf16>
    %c0_85 = arith.constant 0 : index
    %c0_86 = arith.constant 0 : index
    %c0_87 = arith.constant 0 : index
    %249 = vector.load %arg5[%c0_85, %c0_86, %c0_87] : memref<1x8x512xbf16, #tpu.memory_space<vmem>>, vector<1x8x512xbf16>
    %250 = vector.shape_cast %249 : vector<1x8x512xbf16> to vector<8x512xbf16>
    %251 = vector.shape_cast %248 : vector<8x512xbf16> to vector<1x8x512xbf16>
    tpu.vector_store %arg5[%c0_85, %c0_86, %c0_87], %251 {strides = array<i32>} : memref<1x8x512xbf16, #tpu.memory_space<vmem>>, vector<1x8x512xbf16>,
    return
  }
  func.func @transform_0(%arg0: i32) -> (i32, i32, i32) {
    %c0_i32 = arith.constant 0 : i32
    %c0_i32_0 = arith.constant 0 : i32
    %c0_i32_1 = arith.constant 0 : i32
    return %arg0, %c0_i32, %c0_i32_0 : i32, i32, i32
  }
  func.func @transform_1(%arg0: i32) -> (i32, i32) {
    %c0_i32 = arith.constant 0 : i32
    %c0_i32_0 = arith.constant 0 : i32
    %c0_i32_1 = arith.constant 0 : i32
    return %c0_i32, %c0_i32_0 : i32, i32
  }
  func.func @transform_2(%arg0: i32) -> (i32, i32) {
    %c0_i32 = arith.constant 0 : i32
    %c0_i32_0 = arith.constant 0 : i32
    %c0_i32_1 = arith.constant 0 : i32
    return %c0_i32, %c0_i32_0 : i32, i32
  }
  func.func @transform_3(%arg0: i32) -> (i32, i32) {
    %c0_i32 = arith.constant 0 : i32
    %c0_i32_0 = arith.constant 0 : i32
    %c0_i32_1 = arith.constant 0 : i32
    return %c0_i32, %c0_i32_0 : i32, i32
  }
  func.func @transform_4(%arg0: i32) -> (i32, i32, i32) {
    %c0_i32 = arith.constant 0 : i32
    %c0_i32_0 = arith.constant 0 : i32
    %c0_i32_1 = arith.constant 0 : i32
    return %arg0, %c0_i32, %c0_i32_0 : i32, i32, i32
  }
}

</mosaic_0001>

<llo_original>
// kernel: tpu_custom_call.1
$region0: #{tpu_custom_call.1}
  #allocation0 [shape = 'u32[]', space=smem, size = 0x4, offset = 0x4, fixed_abs, tag = 'smem constant byte address 0x4 - core index']
  #allocation1 [shape = 'u32[144,128]{1,0:T(1,128)}', space=vmem, size = 0x12000, scoped, tag = 'internal scratch']
  %s0 = inlined_call_operand.hbm [shape: bf16[2,1,512], index: 0, kind: input, shape index: {}]
  %s1 = inlined_call_operand.hbm [shape: bf16[27,512], index: 1, kind: input, shape index: {}]
  %s2 = inlined_call_operand.hbm [shape: f32[8,27], index: 2, kind: input, shape index: {}]
  %s3 = inlined_call_operand.hbm [shape: f32[8,1], index: 3, kind: input, shape index: {}]
  %s4 = inlined_call_operand.hbm [shape: bf16[2,8,512], index: 4, kind: output, shape index: {}]
  %s5 = sld [smem:[#allocation0]]
  $region65: #{tpu_custom_call.1} parent=0
    _
  %s7 = ssub.s32 1, %s5
  %s8 = scalar_select 0, %s7, %s5
  $region1: #{tpu_custom_call.1} parent=0
    #allocation2 [shape = 'u8[4096]{0}', space=vmem, size = 0x1000, scoped, tag = 'input window, operand 0']
    #allocation3 [shape = 's32[2]{0}', space=sflag, size = 0x8, scoped, tag = 'scoped memory for tpu_custom_call.1']
    #allocation4 [shape = 's32[2]{0}', space=sflag, size = 0x8, scoped, tag = 'scoped memory for tpu_custom_call.1']
    #allocation5 [shape = 'u8[32768]{0}', space=vmem, size = 0x8000, scoped, tag = 'input window, operand 1, single buffered']
    #allocation6 [shape = 's32[1]{0}', space=sflag, size = 0x4, scoped, tag = 'scoped memory for tpu_custom_call.1']
    #allocation7 [shape = 'u8[4096]{0}', space=vmem, size = 0x1000, scoped, tag = 'input window, operand 2, single buffered']
    #allocation8 [shape = 'u8[4096]{0}', space=vmem, size = 0x1000, scoped, tag = 'input window, operand 3, single buffered']
    #allocation9 [shape = 's32[1]{0}', space=sflag, size = 0x4, scoped, tag = 'scoped memory for tpu_custom_call.1']
    #allocation10 [shape = 'u8[16384]{0}', space=vmem, size = 0x4000, scoped, tag = 'output window, operand 0']
    %9 = vsyncpa [#allocation3], 0
    %s10 = scalar_lea.sflag [#allocation3], 1
    %11 = vsyncpa %s10, 0
    %12 = vsyncpa [#allocation6], 0
    %13 = vsyncpa [#allocation9], 0
    %14 = vsyncpa [#allocation4], 0
    %s15 = scalar_lea.sflag [#allocation4], 1
    %16 = vsyncpa %s15, 0
    loop: start=0, step=1, limit=4
    $region2: #{tpu_custom_call.1} parent=1 // loop_pre_header
      _
    $region3: #{tpu_custom_call.1} parent=1 // loop_header
      %s18 = sphi 0, %s22
      %p19 = scmp.ge.s32.totalorder %s18, 4
      %s28 = sphi 0, %s30
      %s31 = sphi 0, %s28
      %s32 = sphi 0, %s31
      %s48 = sphi 0, %s32
      %s52 = sphi 0, %s52
      %s54 = sphi 0, %s52
      %s55 = sphi 0, %s54
      %s69 = sphi 0, %s55
      %s73 = sphi 0, %s73
      %s75 = sphi 0, %s73
      %s76 = sphi 0, %s75
      %s90 = sphi 0, %s76
      %s94 = sphi 0, %s94
      %s96 = sphi 0, %s94
      %s97 = sphi 0, %s96
      %s111 = sphi 0, %s97
      %s117 = sphi 0, %s119
      %s120 = sphi 0, %s117
      %s121 = sphi 0, %s120
      %s137 = sphi 0, %s121
    $region4: #{tpu_custom_call.1} parent=1 // loop_header_branch
      %21 = sbr.rel (%p19) target = $region8
    $region5: #{tpu_custom_call.1} parent=1 // loop_body
      %s23 = ssub.s32 %s18, 1
      %s24 = ssub.s32 %s18, 2
      %s25 = sadd.s32 %s18, 1
      %s26 = ssub.s32 %s18, %s25
      %p27 = scmp.eq.s32.totalorder %s26, 0
      %s29 = sadd.s32 %s28, 1
      %s30 = scalar_select %p27, %s28, %s29
      %p33 = pneg %p27
      %p34 = scmp.eq.s32.totalorder %s18, 1
      %p35 = por %p33, %p34
      %p36 = scmp.ne.s32.totalorder %s28, %s31
      %p37 = scmp.eq.s32.totalorder %s18, 0
      %p38 = por %p36, %p37
      %p39 = scmp.ne.s32.totalorder %s28, %s31
      %p40 = scmp.eq.s32.totalorder %s23, 1
      %p41 = por %p39, %p40
      %p42 = scmp.ne.s32.totalorder %s31, %s32
      %p43 = scmp.eq.s32.totalorder %s23, 0
      %p44 = por %p42, %p43
      %p45 = scmp.ne.s32.totalorder %s31, %s32
      %p46 = scmp.eq.s32.totalorder %s24, 1
      %p47 = por %p45, %p46
      %p49 = scmp.ne.s32.totalorder %s32, %s48
      %p50 = scmp.eq.s32.totalorder %s24, 0
      %p51 = por %p49, %p50
      %s53 = sadd.s32 %s52, 1
      %p56 = scmp.eq.s32.totalorder %s18, 1
      %p57 = scmp.ne.s32.totalorder %s52, %s54
      %p58 = scmp.eq.s32.totalorder %s18, 0
      %p59 = por %p57, %p58
      %p60 = scmp.ne.s32.totalorder %s52, %s54
      %p61 = scmp.eq.s32.totalorder %s23, 1
      %p62 = por %p60, %p61
      %p63 = scmp.ne.s32.totalorder %s54, %s55
      %p64 = scmp.eq.s32.totalorder %s23, 0
      %p65 = por %p63, %p64
      %p66 = scmp.ne.s32.totalorder %s54, %s55
      %p67 = scmp.eq.s32.totalorder %s24, 1
      %p68 = por %p66, %p67
      %p70 = scmp.ne.s32.totalorder %s55, %s69
      %p71 = scmp.eq.s32.totalorder %s24, 0
      %p72 = por %p70, %p71
      %s74 = sadd.s32 %s73, 1
      %p77 = scmp.eq.s32.totalorder %s18, 1
      %p78 = scmp.ne.s32.totalorder %s73, %s75
      %p79 = scmp.eq.s32.totalorder %s18, 0
      %p80 = por %p78, %p79
      %p81 = scmp.ne.s32.totalorder %s73, %s75
      %p82 = scmp.eq.s32.totalorder %s23, 1
      %p83 = por %p81, %p82
      %p84 = scmp.ne.s32.totalorder %s75, %s76
      %p85 = scmp.eq.s32.totalorder %s23, 0
      %p86 = por %p84, %p85
      %p87 = scmp.ne.s32.totalorder %s75, %s76
      %p88 = scmp.eq.s32.totalorder %s24, 1
      %p89 = por %p87, %p88
      %p91 = scmp.ne.s32.totalorder %s76, %s90
      %p92 = scmp.eq.s32.totalorder %s24, 0
      %p93 = por %p91, %p92
      %s95 = sadd.s32 %s94, 1
      %p98 = scmp.eq.s32.totalorder %s18, 1
      %p99 = scmp.ne.s32.totalorder %s94, %s96
      %p100 = scmp.eq.s32.totalorder %s18, 0
      %p101 = por %p99, %p100
      %p102 = scmp.ne.s32.totalorder %s94, %s96
      %p103 = scmp.eq.s32.totalorder %s23, 1
      %p104 = por %p102, %p103
      %p105 = scmp.ne.s32.totalorder %s96, %s97
      %p106 = scmp.eq.s32.totalorder %s23, 0
      %p107 = por %p105, %p106
      %p108 = scmp.ne.s32.totalorder %s96, %s97
      %p109 = scmp.eq.s32.totalorder %s24, 1
      %p110 = por %p108, %p109
      %p112 = scmp.ne.s32.totalorder %s97, %s111
      %p113 = scmp.eq.s32.totalorder %s24, 0
      %p114 = por %p112, %p113
      %s115 = ssub.s32 %s18, %s25
      %p116 = scmp.eq.s32.totalorder %s115, 0
      %s118 = sadd.s32 %s117, 1
      %s119 = scalar_select %p116, %s117, %s118
      %p122 = pneg %p116
      %p123 = scmp.eq.s32.totalorder %s18, 1
      %p124 = por %p122, %p123
      %p125 = scmp.ne.s32.totalorder %s117, %s120
      %p126 = scmp.eq.s32.totalorder %s18, 0
      %p127 = por %p125, %p126
      %p128 = scmp.ne.s32.totalorder %s117, %s120
      %p129 = scmp.eq.s32.totalorder %s23, 1
      %p130 = por %p128, %p129
      %p131 = scmp.ne.s32.totalorder %s120, %s121
      %p132 = scmp.eq.s32.totalorder %s23, 0
      %p133 = por %p131, %p132
      %p134 = scmp.ne.s32.totalorder %s120, %s121
      %p135 = scmp.eq.s32.totalorder %s24, 1
      %p136 = por %p134, %p135
      %p138 = scmp.ne.s32.totalorder %s121, %s137
      %p139 = scmp.eq.s32.totalorder %s24, 0
      %p140 = por %p138, %p139
      %p141 = scmp.le.s32.totalorder 1, %s18
      %p142 = scmp.lt.s32.totalorder %s18, 3
      %p143 = pnand %p141, %p142
      %p144 = pneg %p143
      // Predicated region
      $region9: #{tpu_custom_call.1} parent=5 // pred_check
        _
      $region10: #{tpu_custom_call.1} parent=5 // pred_check_branch
        %146 = sbr.rel (%p143) target = $region12
      $region11: #{tpu_custom_call.1} parent=5 // pred_region
        %s147 = ssub.s32 %s18, 1
        // Predicated region
        $region13: #{tpu_custom_call.1} parent=11 // pred_check
          %p148 = pneg %p65
        $region14: #{tpu_custom_call.1} parent=11 // pred_check_branch
          %150 = sbr.rel (%p148) target = $region16
        $region15: #{tpu_custom_call.1} parent=11 // pred_region
          %s152 = ssub.s32 1024, 1024
          %153 = vsyncadd [#allocation6], %s152
          %s154 = sshll.u32 [#allocation5], 4
          %s155 = int_to_ptr.vmem [resolvable:$true] %s154
          %160 = dma.hbm_to_vmem [thread:$0]  %s1, 1024, %s155, [#allocation6], 256, 256, 16
        $region16: #{tpu_custom_call.1} parent=11 // pred_fallthru
          _
        // Predicated region
        $region17: #{tpu_custom_call.1} parent=11 // pred_check
          %p161 = pneg %p86
        $region18: #{tpu_custom_call.1} parent=11 // pred_check_branch
          %163 = sbr.rel (%p161) target = $region20
        $region19: #{tpu_custom_call.1} parent=11 // pred_region
          %s165 = ssub.s32 128, 128
          %166 = vsyncadd [#allocation6], %s165
          %s168 = sshll.u32 [#allocation7], 4
          %s169 = int_to_ptr.vmem [resolvable:$true] %s168
          %171 = dma.hbm_to_vmem [thread:$0]  %s2, 128, %s169, [#allocation6]
        $region20: #{tpu_custom_call.1} parent=11 // pred_fallthru
          _
        // Predicated region
        $region21: #{tpu_custom_call.1} parent=11 // pred_check
          %p172 = pneg %p107
        $region22: #{tpu_custom_call.1} parent=11 // pred_check_branch
          %174 = sbr.rel (%p172) target = $region24
        $region23: #{tpu_custom_call.1} parent=11 // pred_region
          %s176 = ssub.s32 128, 128
          %177 = vsyncadd [#allocation9], %s176
          %s179 = sshll.u32 [#allocation8], 4
          %s180 = int_to_ptr.vmem [resolvable:$true] %s179
          %182 = dma.hbm_to_vmem [thread:$0]  %s3, 128, %s180, [#allocation9]
        $region24: #{tpu_custom_call.1} parent=11 // pred_fallthru
          _
      $region12: #{tpu_custom_call.1} parent=5 // pred_fallthru
        _
      %p183 = scmp.lt.s32.totalorder %s18, 2
      // Predicated region
      $region25: #{tpu_custom_call.1} parent=5 // pred_check
        %p184 = pneg %p183
      $region26: #{tpu_custom_call.1} parent=5 // pred_check_branch
        %186 = sbr.rel (%p184) target = $region28
      $region27: #{tpu_custom_call.1} parent=5 // pred_region
        // Predicated region
        $region29: #{tpu_custom_call.1} parent=27 // pred_check
          %p187 = pneg %p38
        $region30: #{tpu_custom_call.1} parent=27 // pred_check_branch
          %189 = sbr.rel (%p187) target = $region32
        $region31: #{tpu_custom_call.1} parent=27 // pred_region
          %s190 = sand.u32 %s28, 1
          %s191 = scalar_lea.sflag [#allocation3], %s190
          %s192 = sand.u32 %s28, 1
          %s193 = smul.addr %s192, 4
          %s194 = scalar_lea.vmem [#allocation2], %s193
          %s196 = ssub.s32 64, 64
          %197 = vsyncadd %s191, %s196
          %s198 = smul.addr %s18, 4
          %s199 = smul.addr %s198, 16
          %s200 = scalar_lea.hbm %s0, %s199
          %s202 = sshll.u32 %s194, 4
          %s203 = int_to_ptr.vmem [resolvable:$true] %s202
          %205 = dma.hbm_to_vmem [thread:$0]  %s200, 64, %s203, %s191
        $region32: #{tpu_custom_call.1} parent=27 // pred_fallthru
          _
      $region28: #{tpu_custom_call.1} parent=5 // pred_fallthru
        _
      %p206 = scmp.le.s32.totalorder 1, %s18
      %p207 = scmp.lt.s32.totalorder %s18, 3
      %p208 = pnand %p206, %p207
      %p209 = pneg %p208
      // Predicated region
      $region33: #{tpu_custom_call.1} parent=5 // pred_check
        _
      $region34: #{tpu_custom_call.1} parent=5 // pred_check_branch
        %211 = sbr.rel (%p208) target = $region36
      $region35: #{tpu_custom_call.1} parent=5 // pred_region
        %s212 = ssub.s32 %s18, 1
        %s213 = sand.u32 %s31, 1
        %s214 = scalar_lea.sflag [#allocation3], %s213
        %s215 = sand.u32 %s31, 1
        %s216 = smul.addr %s215, 4
        %s217 = scalar_lea.vmem [#allocation2], %s216
        // Predicated region
        $region37: #{tpu_custom_call.1} parent=35 // pred_check
          %p218 = pneg %p44
        $region38: #{tpu_custom_call.1} parent=35 // pred_check_branch
          %220 = sbr.rel (%p218) target = $region40
        $region39: #{tpu_custom_call.1} parent=35 // pred_region
          %221 = dma.done %s214, 64
        $region40: #{tpu_custom_call.1} parent=35 // pred_fallthru
          _
        // Predicated region
        $region41: #{tpu_custom_call.1} parent=35 // pred_check
          %p222 = pneg %p65
        $region42: #{tpu_custom_call.1} parent=35 // pred_check_branch
          %224 = sbr.rel (%p222) target = $region44
        $region43: #{tpu_custom_call.1} parent=35 // pred_region
          %225 = dma.done [#allocation6], 1024
        $region44: #{tpu_custom_call.1} parent=35 // pred_fallthru
          _
        // Predicated region
        $region45: #{tpu_custom_call.1} parent=35 // pred_check
          %p226 = pneg %p86
        $region46: #{tpu_custom_call.1} parent=35 // pred_check_branch
          %228 = sbr.rel (%p226) target = $region48
        $region47: #{tpu_custom_call.1} parent=35 // pred_region
          %229 = dma.done [#allocation6], 128
        $region48: #{tpu_custom_call.1} parent=35 // pred_fallthru
          _
        // Predicated region
        $region49: #{tpu_custom_call.1} parent=35 // pred_check
          %p230 = pneg %p107
        $region50: #{tpu_custom_call.1} parent=35 // pred_check_branch
          %232 = sbr.rel (%p230) target = $region52
        $region51: #{tpu_custom_call.1} parent=35 // pred_region
          %233 = dma.done [#allocation9], 128
        $region52: #{tpu_custom_call.1} parent=35 // pred_fallthru
          _
        %s234 = sand.u32 %s31, 1
        %s235 = scalar_lea.sflag [#allocation3], %s234
        %s236 = sand.u32 %s31, 1
        %s237 = smul.addr %s236, 4
        %s238 = scalar_lea.vmem [#allocation2], %s237
        %p239 = pneg %p44
        %p240 = pneg %p41
        %p241 = pneg %p65
        %p242 = pneg %p62
        %p243 = pneg %p86
        %p244 = pneg %p83
        %p245 = pneg %p107
        %p246 = pneg %p104
        %p247 = pneg %p133
        %p248 = pneg %p130
        %s249 = sand.u32 %s120, 1
        %s250 = scalar_lea.sflag [#allocation4], %s249
        %s251 = sand.u32 %s120, 1
        %s252 = smul.addr %s251, 16
        %s253 = scalar_lea.vmem [#allocation10], %s252
        %v254 = vld [vmem:[%s217] sm:$0xf]
        %v255 = vunpack.c.l.bf16 %v254
        %v257 = vlaneseq
        %v258 = vshrl.u32 %v257, 7
        %v259 = vsub.s32 0, %v258
        %v260 = vrot.slane %v255, %v259
        %v261 = vlaneseq
        %v262 = vshrl.u32 %v261, 7
        %v263 = vsub.s32 2, %v262
        %v264 = vrot.slane %v255, %v263
        %v265 = vlaneseq
        %v266 = vshrl.u32 %v265, 7
        %v267 = vsub.s32 4, %v266
        %v268 = vrot.slane %v255, %v267
        %v269 = vlaneseq
        %v270 = vshrl.u32 %v269, 7
        %v271 = vsub.s32 6, %v270
        %v272 = vrot.slane %v255, %v271
        %277 = vrot.lane.b32.xlu0 %v260, 73
        %v278 = vpop.permute.xlu0 %277
        %279 = vrot.lane.b32.xlu0 %v264, 73
        %v280 = vpop.permute.xlu0 %279
        %281 = vrot.lane.b32.xlu0 %v268, 73
        %v282 = vpop.permute.xlu0 %281
        %283 = vrot.lane.b32.xlu0 %v272, 73
        %v284 = vpop.permute.xlu0 %283
        %v285 = vlaneseq
        %v286 = vand.u32 %v285, 127
        %vm287 = vcmp.lt.s32.totalorder %v286, 73
        %v288 = vsel %vm287, %v282, %v284
        %v289 = vsel %vm287, %v280, %v282
        %v290 = vsel %vm287, %v278, %v280
        %v291 = vsel %vm287, %v284, %v278
        %v292 = vld [vmem:[#allocation5] sm:$0x11]
        %v293 = vld [vmem:[#allocation5 + $0x8] sm:$0x11]
        %v294 = vunpack.c.l.bf16 %v292
        %v295 = vunpack.c.h.bf16 %v292
        %v296 = vunpack.c.l.bf16 %v293
        %v297 = vunpack.c.h.bf16 %v293
        %v298 = vmul.f32 %v291, %v294
        %v299 = vmul.f32 %v290, %v295
        %v300 = vmul.f32 %v289, %v296
        %v301 = vmul.f32 %v288, %v297
        %v302 = vld [vmem:[#allocation7] sm:$0xff]
        %304 = vset.pattern.permute.xlu0 0
        %305 = vperm.xlu0 %304, %v302
        %v306 = vpop.permute.xlu0 %305
        %v308 = vlaneseq
        %v309 = vshrl.u32 %v308, 7
        %v310 = vsub.s32 0, %v309
        %v311 = vrot.slane %v298, %v310
        %v312 = vlaneseq
        %v313 = vshrl.u32 %v312, 7
        %v314 = vsub.s32 0, %v313
        %v315 = vrot.slane %v299, %v314
        %v316 = vlaneseq
        %v317 = vshrl.u32 %v316, 7
        %v318 = vsub.s32 0, %v317
        %v319 = vrot.slane %v300, %v318
        %v320 = vlaneseq
        %v321 = vshrl.u32 %v320, 7
        %v322 = vsub.s32 0, %v321
        %v323 = vrot.slane %v301, %v322
        %v324 = vmul.f32 %v306, %v311
        %v325 = vmul.f32 %v306, %v315
        %v326 = vmul.f32 %v306, %v319
        %v327 = vmul.f32 %v306, %v323
        %v328 = vadd.f32 %v324, 0.0
        %v329 = vadd.f32 %v325, 0.0
        %v330 = vadd.f32 %v326, 0.0
        %v331 = vadd.f32 %v327, 0.0
        %332 = vrot.lane.b32.xlu0 %v260, 72
        %v333 = vpop.permute.xlu0 %332
        %334 = vrot.lane.b32.xlu0 %v264, 72
        %v335 = vpop.permute.xlu0 %334
        %336 = vrot.lane.b32.xlu0 %v268, 72
        %v337 = vpop.permute.xlu0 %336
        %338 = vrot.lane.b32.xlu0 %v272, 72
        %v339 = vpop.permute.xlu0 %338
        %vm340 = vcmp.lt.s32.totalorder %v286, 72
        %v341 = vsel %vm340, %v337, %v339
        %v342 = vsel %vm340, %v335, %v337
        %v343 = vsel %vm340, %v333, %v335
        %v344 = vsel %vm340, %v339, %v333
        %v349 = vrot.slane %v294, 1
        %v350 = vrot.slane %v295, 1
        %v351 = vrot.slane %v296, 1
        %v352 = vrot.slane %v297, 1
        %v357 = vmul.f32 %v344, %v349
        %v358 = vmul.f32 %v343, %v350
        %v359 = vmul.f32 %v342, %v351
        %v360 = vmul.f32 %v341, %v352
        %361 = vset.pattern.permute.xlu0 1
        %362 = vperm.xlu0 %361, %v302
        %v363 = vpop.permute.xlu0 %362
        %v365 = vlaneseq
        %v366 = vshrl.u32 %v365, 7
        %v367 = vsub.s32 0, %v366
        %v368 = vrot.slane %v357, %v367
        %v369 = vlaneseq
        %v370 = vshrl.u32 %v369, 7
        %v371 = vsub.s32 0, %v370
        %v372 = vrot.slane %v358, %v371
        %v373 = vlaneseq
        %v374 = vshrl.u32 %v373, 7
        %v375 = vsub.s32 0, %v374
        %v376 = vrot.slane %v359, %v375
        %v377 = vlaneseq
        %v378 = vshrl.u32 %v377, 7
        %v379 = vsub.s32 0, %v378
        %v380 = vrot.slane %v360, %v379
        %v381 = vmul.f32 %v363, %v368
        %v382 = vmul.f32 %v363, %v372
        %v383 = vmul.f32 %v363, %v376
        %v384 = vmul.f32 %v363, %v380
        %v385 = vadd.f32 %v328, %v381
        %v386 = vadd.f32 %v329, %v382
        %v387 = vadd.f32 %v330, %v383
        %v388 = vadd.f32 %v331, %v384
        %389 = vrot.lane.b32.xlu0 %v260, 71
        %v390 = vpop.permute.xlu0 %389
        %391 = vrot.lane.b32.xlu0 %v264, 71
        %v392 = vpop.permute.xlu0 %391
        %393 = vrot.lane.b32.xlu0 %v268, 71
        %v394 = vpop.permute.xlu0 %393
        %395 = vrot.lane.b32.xlu0 %v272, 71
        %v396 = vpop.permute.xlu0 %395
        %vm397 = vcmp.lt.s32.totalorder %v286, 71
        %v398 = vsel %vm397, %v394, %v396
        %v399 = vsel %vm397, %v392, %v394
        %v400 = vsel %vm397, %v390, %v392
        %v401 = vsel %vm397, %v396, %v390
        %v402 = vld [vmem:[#allocation5] sm:$0x22]
        %v403 = vld [vmem:[#allocation5 + $0x8] sm:$0x22]
        %v404 = vunpack.c.l.bf16 %v402
        %v405 = vunpack.c.h.bf16 %v402
        %v406 = vunpack.c.l.bf16 %v403
        %v407 = vunpack.c.h.bf16 %v403
        %v412 = vrot.slane %v404, 2
        %v413 = vrot.slane %v405, 2
        %v414 = vrot.slane %v406, 2
        %v415 = vrot.slane %v407, 2
        %v420 = vmul.f32 %v401, %v412
        %v421 = vmul.f32 %v400, %v413
        %v422 = vmul.f32 %v399, %v414
        %v423 = vmul.f32 %v398, %v415
        %424 = vset.pattern.permute.xlu0 2
        %425 = vperm.xlu0 %424, %v302
        %v426 = vpop.permute.xlu0 %425
        %v428 = vlaneseq
        %v429 = vshrl.u32 %v428, 7
        %v430 = vsub.s32 0, %v429
        %v431 = vrot.slane %v420, %v430
        %v432 = vlaneseq
        %v433 = vshrl.u32 %v432, 7
        %v434 = vsub.s32 0, %v433
        %v435 = vrot.slane %v421, %v434
        %v436 = vlaneseq
        %v437 = vshrl.u32 %v436, 7
        %v438 = vsub.s32 0, %v437
        %v439 = vrot.slane %v422, %v438
        %v440 = vlaneseq
        %v441 = vshrl.u32 %v440, 7
        %v442 = vsub.s32 0, %v441
        %v443 = vrot.slane %v423, %v442
        %v444 = vmul.f32 %v426, %v431
        %v445 = vmul.f32 %v426, %v435
        %v446 = vmul.f32 %v426, %v439
        %v447 = vmul.f32 %v426, %v443
        %v448 = vadd.f32 %v385, %v444
        %v449 = vadd.f32 %v386, %v445
        %v450 = vadd.f32 %v387, %v446
        %v451 = vadd.f32 %v388, %v447
        %452 = vrot.lane.b32.xlu0 %v260, 65
        %v453 = vpop.permute.xlu0 %452
        %454 = vrot.lane.b32.xlu0 %v264, 65
        %v455 = vpop.permute.xlu0 %454
        %456 = vrot.lane.b32.xlu0 %v268, 65
        %v457 = vpop.permute.xlu0 %456
        %458 = vrot.lane.b32.xlu0 %v272, 65
        %v459 = vpop.permute.xlu0 %458
        %vm460 = vcmp.lt.s32.totalorder %v286, 65
        %v461 = vsel %vm460, %v457, %v459
        %v462 = vsel %vm460, %v455, %v457
        %v463 = vsel %vm460, %v453, %v455
        %v464 = vsel %vm460, %v459, %v453
        %v465 = vrot.slane %v404, 3
        %v466 = vrot.slane %v405, 3
        %v467 = vrot.slane %v406, 3
        %v468 = vrot.slane %v407, 3
        %v473 = vmul.f32 %v464, %v465
        %v474 = vmul.f32 %v463, %v466
        %v475 = vmul.f32 %v462, %v467
        %v476 = vmul.f32 %v461, %v468
        %477 = vset.pattern.permute.xlu0 3
        %478 = vperm.xlu0 %477, %v302
        %v479 = vpop.permute.xlu0 %478
        %v481 = vlaneseq
        %v482 = vshrl.u32 %v481, 7
        %v483 = vsub.s32 0, %v482
        %v484 = vrot.slane %v473, %v483
        %v485 = vlaneseq
        %v486 = vshrl.u32 %v485, 7
        %v487 = vsub.s32 0, %v486
        %v488 = vrot.slane %v474, %v487
        %v489 = vlaneseq
        %v490 = vshrl.u32 %v489, 7
        %v491 = vsub.s32 0, %v490
        %v492 = vrot.slane %v475, %v491
        %v493 = vlaneseq
        %v494 = vshrl.u32 %v493, 7
        %v495 = vsub.s32 0, %v494
        %v496 = vrot.slane %v476, %v495
        %v497 = vmul.f32 %v479, %v484
        %v498 = vmul.f32 %v479, %v488
        %v499 = vmul.f32 %v479, %v492
        %v500 = vmul.f32 %v479, %v496
        %v501 = vadd.f32 %v448, %v497
        %v502 = vadd.f32 %v449, %v498
        %v503 = vadd.f32 %v450, %v499
        %v504 = vadd.f32 %v451, %v500
        %505 = vrot.lane.b32.xlu0 %v260, 64
        %v506 = vpop.permute.xlu0 %505
        %507 = vrot.lane.b32.xlu0 %v264, 64
        %v508 = vpop.permute.xlu0 %507
        %509 = vrot.lane.b32.xlu0 %v268, 64
        %v510 = vpop.permute.xlu0 %509
        %511 = vrot.lane.b32.xlu0 %v272, 64
        %v512 = vpop.permute.xlu0 %511
        %vm513 = vcmp.lt.s32.totalorder %v286, 64
        %v514 = vsel %vm513, %v510, %v512
        %v515 = vsel %vm513, %v508, %v510
        %v516 = vsel %vm513, %v506, %v508
        %v517 = vsel %vm513, %v512, %v506
        %v518 = vld [vmem:[#allocation5] sm:$0x44]
        %v519 = vld [vmem:[#allocation5 + $0x8] sm:$0x44]
        %v520 = vunpack.c.l.bf16 %v518
        %v521 = vunpack.c.h.bf16 %v518
        %v522 = vunpack.c.l.bf16 %v519
        %v523 = vunpack.c.h.bf16 %v519
        %v528 = vrot.slane %v520, 4
        %v529 = vrot.slane %v521, 4
        %v530 = vrot.slane %v522, 4
        %v531 = vrot.slane %v523, 4
        %v536 = vmul.f32 %v517, %v528
        %v537 = vmul.f32 %v516, %v529
        %v538 = vmul.f32 %v515, %v530
        %v539 = vmul.f32 %v514, %v531
        %540 = vset.pattern.permute.xlu0 4
        %541 = vperm.xlu0 %540, %v302
        %v542 = vpop.permute.xlu0 %541
        %v544 = vlaneseq
        %v545 = vshrl.u32 %v544, 7
        %v546 = vsub.s32 0, %v545
        %v547 = vrot.slane %v536, %v546
        %v548 = vlaneseq
        %v549 = vshrl.u32 %v548, 7
        %v550 = vsub.s32 0, %v549
        %v551 = vrot.slane %v537, %v550
        %v552 = vlaneseq
        %v553 = vshrl.u32 %v552, 7
        %v554 = vsub.s32 0, %v553
        %v555 = vrot.slane %v538, %v554
        %v556 = vlaneseq
        %v557 = vshrl.u32 %v556, 7
        %v558 = vsub.s32 0, %v557
        %v559 = vrot.slane %v539, %v558
        %v560 = vmul.f32 %v542, %v547
        %v561 = vmul.f32 %v542, %v551
        %v562 = vmul.f32 %v542, %v555
        %v563 = vmul.f32 %v542, %v559
        %v564 = vadd.f32 %v501, %v560
        %v565 = vadd.f32 %v502, %v561
        %v566 = vadd.f32 %v503, %v562
        %v567 = vadd.f32 %v504, %v563
        %568 = vrot.lane.b32.xlu0 %v260, 63
        %v569 = vpop.permute.xlu0 %568
        %570 = vrot.lane.b32.xlu0 %v264, 63
        %v571 = vpop.permute.xlu0 %570
        %572 = vrot.lane.b32.xlu0 %v268, 63
        %v573 = vpop.permute.xlu0 %572
        %574 = vrot.lane.b32.xlu0 %v272, 63
        %v575 = vpop.permute.xlu0 %574
        %vm576 = vcmp.lt.s32.totalorder %v286, 63
        %v577 = vsel %vm576, %v573, %v575
        %v578 = vsel %vm576, %v571, %v573
        %v579 = vsel %vm576, %v569, %v571
        %v580 = vsel %vm576, %v575, %v569
        %v581 = vrot.slane %v520, 5
        %v582 = vrot.slane %v521, 5
        %v583 = vrot.slane %v522, 5
        %v584 = vrot.slane %v523, 5
        %v589 = vmul.f32 %v580, %v581
        %v590 = vmul.f32 %v579, %v582
        %v591 = vmul.f32 %v578, %v583
        %v592 = vmul.f32 %v577, %v584
        %593 = vset.pattern.permute.xlu0 5
        %594 = vperm.xlu0 %593, %v302
        %v595 = vpop.permute.xlu0 %594
        %v597 = vlaneseq
        %v598 = vshrl.u32 %v597, 7
        %v599 = vsub.s32 0, %v598
        %v600 = vrot.slane %v589, %v599
        %v601 = vlaneseq
        %v602 = vshrl.u32 %v601, 7
        %v603 = vsub.s32 0, %v602
        %v604 = vrot.slane %v590, %v603
        %v605 = vlaneseq
        %v606 = vshrl.u32 %v605, 7
        %v607 = vsub.s32 0, %v606
        %v608 = vrot.slane %v591, %v607
        %v609 = vlaneseq
        %v610 = vshrl.u32 %v609, 7
        %v611 = vsub.s32 0, %v610
        %v612 = vrot.slane %v592, %v611
        %v613 = vmul.f32 %v595, %v600
        %v614 = vmul.f32 %v595, %v604
        %v615 = vmul.f32 %v595, %v608
        %v616 = vmul.f32 %v595, %v612
        %v617 = vadd.f32 %v564, %v613
        %v618 = vadd.f32 %v565, %v614
        %v619 = vadd.f32 %v566, %v615
        %v620 = vadd.f32 %v567, %v616
        %621 = vrot.lane.b32.xlu0 %v260, 57
        %v622 = vpop.permute.xlu0 %621
        %623 = vrot.lane.b32.xlu0 %v264, 57
        %v624 = vpop.permute.xlu0 %623
        %625 = vrot.lane.b32.xlu0 %v268, 57
        %v626 = vpop.permute.xlu0 %625
        %627 = vrot.lane.b32.xlu0 %v272, 57
        %v628 = vpop.permute.xlu0 %627
        %vm629 = vcmp.lt.s32.totalorder %v286, 57
        %v630 = vsel %vm629, %v626, %v628
        %v631 = vsel %vm629, %v624, %v626
        %v632 = vsel %vm629, %v622, %v624
        %v633 = vsel %vm629, %v628, %v622
        %v634 = vld [vmem:[#allocation5] sm:$0x88]
        %v635 = vld [vmem:[#allocation5 + $0x8] sm:$0x88]
        %v636 = vunpack.c.l.bf16 %v634
        %v637 = vunpack.c.h.bf16 %v634
        %v638 = vunpack.c.l.bf16 %v635
        %v639 = vunpack.c.h.bf16 %v635
        %v644 = vrot.slane %v636, 6
        %v645 = vrot.slane %v637, 6
        %v646 = vrot.slane %v638, 6
        %v647 = vrot.slane %v639, 6
        %v652 = vmul.f32 %v633, %v644
        %v653 = vmul.f32 %v632, %v645
        %v654 = vmul.f32 %v631, %v646
        %v655 = vmul.f32 %v630, %v647
        %656 = vset.pattern.permute.xlu0 6
        %657 = vperm.xlu0 %656, %v302
        %v658 = vpop.permute.xlu0 %657
        %v660 = vlaneseq
        %v661 = vshrl.u32 %v660, 7
        %v662 = vsub.s32 0, %v661
        %v663 = vrot.slane %v652, %v662
        %v664 = vlaneseq
        %v665 = vshrl.u32 %v664, 7
        %v666 = vsub.s32 0, %v665
        %v667 = vrot.slane %v653, %v666
        %v668 = vlaneseq
        %v669 = vshrl.u32 %v668, 7
        %v670 = vsub.s32 0, %v669
        %v671 = vrot.slane %v654, %v670
        %v672 = vlaneseq
        %v673 = vshrl.u32 %v672, 7
        %v674 = vsub.s32 0, %v673
        %v675 = vrot.slane %v655, %v674
        %v676 = vmul.f32 %v658, %v663
        %v677 = vmul.f32 %v658, %v667
        %v678 = vmul.f32 %v658, %v671
        %v679 = vmul.f32 %v658, %v675
        %v680 = vadd.f32 %v617, %v676
        %v681 = vadd.f32 %v618, %v677
        %v682 = vadd.f32 %v619, %v678
        %v683 = vadd.f32 %v620, %v679
        %684 = vrot.lane.b32.xlu0 %v260, 56
        %v685 = vpop.permute.xlu0 %684
        %686 = vrot.lane.b32.xlu0 %v264, 56
        %v687 = vpop.permute.xlu0 %686
        %688 = vrot.lane.b32.xlu0 %v268, 56
        %v689 = vpop.permute.xlu0 %688
        %690 = vrot.lane.b32.xlu0 %v272, 56
        %v691 = vpop.permute.xlu0 %690
        %vm692 = vcmp.lt.s32.totalorder %v286, 56
        %v693 = vsel %vm692, %v689, %v691
        %v694 = vsel %vm692, %v687, %v689
        %v695 = vsel %vm692, %v685, %v687
        %v696 = vsel %vm692, %v691, %v685
        %v697 = vrot.slane %v636, 7
        %v698 = vrot.slane %v637, 7
        %v699 = vrot.slane %v638, 7
        %v700 = vrot.slane %v639, 7
        %v705 = vmul.f32 %v696, %v697
        %v706 = vmul.f32 %v695, %v698
        %v707 = vmul.f32 %v694, %v699
        %v708 = vmul.f32 %v693, %v700
        %709 = vset.pattern.permute.xlu0 7
        %710 = vperm.xlu0 %709, %v302
        %v711 = vpop.permute.xlu0 %710
        %v713 = vlaneseq
        %v714 = vshrl.u32 %v713, 7
        %v715 = vsub.s32 0, %v714
        %v716 = vrot.slane %v705, %v715
        %v717 = vlaneseq
        %v718 = vshrl.u32 %v717, 7
        %v719 = vsub.s32 0, %v718
        %v720 = vrot.slane %v706, %v719
        %v721 = vlaneseq
        %v722 = vshrl.u32 %v721, 7
        %v723 = vsub.s32 0, %v722
        %v724 = vrot.slane %v707, %v723
        %v725 = vlaneseq
        %v726 = vshrl.u32 %v725, 7
        %v727 = vsub.s32 0, %v726
        %v728 = vrot.slane %v708, %v727
        %v729 = vmul.f32 %v711, %v716
        %v730 = vmul.f32 %v711, %v720
        %v731 = vmul.f32 %v711, %v724
        %v732 = vmul.f32 %v711, %v728
        %v733 = vadd.f32 %v680, %v729
        %v734 = vadd.f32 %v681, %v730
        %v735 = vadd.f32 %v682, %v731
        %v736 = vadd.f32 %v683, %v732
        %737 = vrot.lane.b32.xlu0 %v260, 55
        %v738 = vpop.permute.xlu0 %737
        %739 = vrot.lane.b32.xlu0 %v264, 55
        %v740 = vpop.permute.xlu0 %739
        %741 = vrot.lane.b32.xlu0 %v268, 55
        %v742 = vpop.permute.xlu0 %741
        %743 = vrot.lane.b32.xlu0 %v272, 55
        %v744 = vpop.permute.xlu0 %743
        %vm745 = vcmp.lt.s32.totalorder %v286, 55
        %v746 = vsel %vm745, %v742, %v744
        %v747 = vsel %vm745, %v740, %v742
        %v748 = vsel %vm745, %v738, %v740
        %v749 = vsel %vm745, %v744, %v738
        %v750 = vld [vmem:[#allocation5 + $0x10] sm:$0x11]
        %v751 = vld [vmem:[#allocation5 + $0x18] sm:$0x11]
        %v752 = vunpack.c.l.bf16 %v750
        %v753 = vunpack.c.h.bf16 %v750
        %v754 = vunpack.c.l.bf16 %v751
        %v755 = vunpack.c.h.bf16 %v751
        %v756 = vmul.f32 %v749, %v752
        %v757 = vmul.f32 %v748, %v753
        %v758 = vmul.f32 %v747, %v754
        %v759 = vmul.f32 %v746, %v755
        %760 = vset.pattern.permute.xlu0 8
        %761 = vperm.xlu0 %760, %v302
        %v762 = vpop.permute.xlu0 %761
        %v764 = vlaneseq
        %v765 = vshrl.u32 %v764, 7
        %v766 = vsub.s32 0, %v765
        %v767 = vrot.slane %v756, %v766
        %v768 = vlaneseq
        %v769 = vshrl.u32 %v768, 7
        %v770 = vsub.s32 0, %v769
        %v771 = vrot.slane %v757, %v770
        %v772 = vlaneseq
        %v773 = vshrl.u32 %v772, 7
        %v774 = vsub.s32 0, %v773
        %v775 = vrot.slane %v758, %v774
        %v776 = vlaneseq
        %v777 = vshrl.u32 %v776, 7
        %v778 = vsub.s32 0, %v777
        %v779 = vrot.slane %v759, %v778
        %v780 = vmul.f32 %v762, %v767
        %v781 = vmul.f32 %v762, %v771
        %v782 = vmul.f32 %v762, %v775
        %v783 = vmul.f32 %v762, %v779
        %v784 = vadd.f32 %v733, %v780
        %v785 = vadd.f32 %v734, %v781
        %v786 = vadd.f32 %v735, %v782
        %v787 = vadd.f32 %v736, %v783
        %788 = vrot.lane.b32.xlu0 %v260, 9
        %v789 = vpop.permute.xlu0 %788
        %790 = vrot.lane.b32.xlu0 %v264, 9
        %v791 = vpop.permute.xlu0 %790
        %792 = vrot.lane.b32.xlu0 %v268, 9
        %v793 = vpop.permute.xlu0 %792
        %794 = vrot.lane.b32.xlu0 %v272, 9
        %v795 = vpop.permute.xlu0 %794
        %vm796 = vcmp.lt.s32.totalorder %v286, 9
        %v797 = vsel %vm796, %v793, %v795
        %v798 = vsel %vm796, %v791, %v793
        %v799 = vsel %vm796, %v789, %v791
        %v800 = vsel %vm796, %v795, %v789
        %v805 = vrot.slane %v752, 1
        %v806 = vrot.slane %v753, 1
        %v807 = vrot.slane %v754, 1
        %v808 = vrot.slane %v755, 1
        %v813 = vmul.f32 %v800, %v805
        %v814 = vmul.f32 %v799, %v806
        %v815 = vmul.f32 %v798, %v807
        %v816 = vmul.f32 %v797, %v808
        %817 = vset.pattern.permute.xlu0 9
        %818 = vperm.xlu0 %817, %v302
        %v819 = vpop.permute.xlu0 %818
        %v821 = vlaneseq
        %v822 = vshrl.u32 %v821, 7
        %v823 = vsub.s32 0, %v822
        %v824 = vrot.slane %v813, %v823
        %v825 = vlaneseq
        %v826 = vshrl.u32 %v825, 7
        %v827 = vsub.s32 0, %v826
        %v828 = vrot.slane %v814, %v827
        %v829 = vlaneseq
        %v830 = vshrl.u32 %v829, 7
        %v831 = vsub.s32 0, %v830
        %v832 = vrot.slane %v815, %v831
        %v833 = vlaneseq
        %v834 = vshrl.u32 %v833, 7
        %v835 = vsub.s32 0, %v834
        %v836 = vrot.slane %v816, %v835
        %v837 = vmul.f32 %v819, %v824
        %v838 = vmul.f32 %v819, %v828
        %v839 = vmul.f32 %v819, %v832
        %v840 = vmul.f32 %v819, %v836
        %v841 = vadd.f32 %v784, %v837
        %v842 = vadd.f32 %v785, %v838
        %v843 = vadd.f32 %v786, %v839
        %v844 = vadd.f32 %v787, %v840
        %845 = vrot.lane.b32.xlu0 %v260, 8
        %v846 = vpop.permute.xlu0 %845
        %847 = vrot.lane.b32.xlu0 %v264, 8
        %v848 = vpop.permute.xlu0 %847
        %849 = vrot.lane.b32.xlu0 %v268, 8
        %v850 = vpop.permute.xlu0 %849
        %851 = vrot.lane.b32.xlu0 %v272, 8
        %v852 = vpop.permute.xlu0 %851
        %vm853 = vcmp.lt.s32.totalorder %v286, 8
        %v854 = vsel %vm853, %v850, %v852
        %v855 = vsel %vm853, %v848, %v850
        %v856 = vsel %vm853, %v846, %v848
        %v857 = vsel %vm853, %v852, %v846
        %v858 = vld [vmem:[#allocation5 + $0x10] sm:$0x22]
        %v859 = vld [vmem:[#allocation5 + $0x18] sm:$0x22]
        %v860 = vunpack.c.l.bf16 %v858
        %v861 = vunpack.c.h.bf16 %v858
        %v862 = vunpack.c.l.bf16 %v859
        %v863 = vunpack.c.h.bf16 %v859
        %v868 = vrot.slane %v860, 2
        %v869 = vrot.slane %v861, 2
        %v870 = vrot.slane %v862, 2
        %v871 = vrot.slane %v863, 2
        %v876 = vmul.f32 %v857, %v868
        %v877 = vmul.f32 %v856, %v869
        %v878 = vmul.f32 %v855, %v870
        %v879 = vmul.f32 %v854, %v871
        %880 = vset.pattern.permute.xlu0 10
        %881 = vperm.xlu0 %880, %v302
        %v882 = vpop.permute.xlu0 %881
        %v884 = vlaneseq
        %v885 = vshrl.u32 %v884, 7
        %v886 = vsub.s32 0, %v885
        %v887 = vrot.slane %v876, %v886
        %v888 = vlaneseq
        %v889 = vshrl.u32 %v888, 7
        %v890 = vsub.s32 0, %v889
        %v891 = vrot.slane %v877, %v890
        %v892 = vlaneseq
        %v893 = vshrl.u32 %v892, 7
        %v894 = vsub.s32 0, %v893
        %v895 = vrot.slane %v878, %v894
        %v896 = vlaneseq
        %v897 = vshrl.u32 %v896, 7
        %v898 = vsub.s32 0, %v897
        %v899 = vrot.slane %v879, %v898
        %v900 = vmul.f32 %v882, %v887
        %v901 = vmul.f32 %v882, %v891
        %v902 = vmul.f32 %v882, %v895
        %v903 = vmul.f32 %v882, %v899
        %v904 = vadd.f32 %v841, %v900
        %v905 = vadd.f32 %v842, %v901
        %v906 = vadd.f32 %v843, %v902
        %v907 = vadd.f32 %v844, %v903
        %908 = vrot.lane.b32.xlu0 %v260, 7
        %v909 = vpop.permute.xlu0 %908
        %910 = vrot.lane.b32.xlu0 %v264, 7
        %v911 = vpop.permute.xlu0 %910
        %912 = vrot.lane.b32.xlu0 %v268, 7
        %v913 = vpop.permute.xlu0 %912
        %914 = vrot.lane.b32.xlu0 %v272, 7
        %v915 = vpop.permute.xlu0 %914
        %vm916 = vcmp.lt.s32.totalorder %v286, 7
        %v917 = vsel %vm916, %v913, %v915
        %v918 = vsel %vm916, %v911, %v913
        %v919 = vsel %vm916, %v909, %v911
        %v920 = vsel %vm916, %v915, %v909
        %v921 = vrot.slane %v860, 3
        %v922 = vrot.slane %v861, 3
        %v923 = vrot.slane %v862, 3
        %v924 = vrot.slane %v863, 3
        %v929 = vmul.f32 %v920, %v921
        %v930 = vmul.f32 %v919, %v922
        %v931 = vmul.f32 %v918, %v923
        %v932 = vmul.f32 %v917, %v924
        %933 = vset.pattern.permute.xlu0 11
        %934 = vperm.xlu0 %933, %v302
        %v935 = vpop.permute.xlu0 %934
        %v937 = vlaneseq
        %v938 = vshrl.u32 %v937, 7
        %v939 = vsub.s32 0, %v938
        %v940 = vrot.slane %v929, %v939
        %v941 = vlaneseq
        %v942 = vshrl.u32 %v941, 7
        %v943 = vsub.s32 0, %v942
        %v944 = vrot.slane %v930, %v943
        %v945 = vlaneseq
        %v946 = vshrl.u32 %v945, 7
        %v947 = vsub.s32 0, %v946
        %v948 = vrot.slane %v931, %v947
        %v949 = vlaneseq
        %v950 = vshrl.u32 %v949, 7
        %v951 = vsub.s32 0, %v950
        %v952 = vrot.slane %v932, %v951
        %v953 = vmul.f32 %v935, %v940
        %v954 = vmul.f32 %v935, %v944
        %v955 = vmul.f32 %v935, %v948
        %v956 = vmul.f32 %v935, %v952
        %v957 = vadd.f32 %v904, %v953
        %v958 = vadd.f32 %v905, %v954
        %v959 = vadd.f32 %v906, %v955
        %v960 = vadd.f32 %v907, %v956
        %961 = vrot.lane.b32.xlu0 %v260, 1
        %v962 = vpop.permute.xlu0 %961
        %963 = vrot.lane.b32.xlu0 %v264, 1
        %v964 = vpop.permute.xlu0 %963
        %965 = vrot.lane.b32.xlu0 %v268, 1
        %v966 = vpop.permute.xlu0 %965
        %967 = vrot.lane.b32.xlu0 %v272, 1
        %v968 = vpop.permute.xlu0 %967
        %vm969 = vcmp.lt.s32.totalorder %v286, 1
        %v970 = vsel %vm969, %v966, %v968
        %v971 = vsel %vm969, %v964, %v966
        %v972 = vsel %vm969, %v962, %v964
        %v973 = vsel %vm969, %v968, %v962
        %v974 = vld [vmem:[#allocation5 + $0x10] sm:$0x44]
        %v975 = vld [vmem:[#allocation5 + $0x18] sm:$0x44]
        %v976 = vunpack.c.l.bf16 %v974
        %v977 = vunpack.c.h.bf16 %v974
        %v978 = vunpack.c.l.bf16 %v975
        %v979 = vunpack.c.h.bf16 %v975
        %v984 = vrot.slane %v976, 4
        %v985 = vrot.slane %v977, 4
        %v986 = vrot.slane %v978, 4
        %v987 = vrot.slane %v979, 4
        %v992 = vmul.f32 %v973, %v984
        %v993 = vmul.f32 %v972, %v985
        %v994 = vmul.f32 %v971, %v986
        %v995 = vmul.f32 %v970, %v987
        %996 = vset.pattern.permute.xlu0 12
        %997 = vperm.xlu0 %996, %v302
        %v998 = vpop.permute.xlu0 %997
        %v1000 = vlaneseq
        %v1001 = vshrl.u32 %v1000, 7
        %v1002 = vsub.s32 0, %v1001
        %v1003 = vrot.slane %v992, %v1002
        %v1004 = vlaneseq
        %v1005 = vshrl.u32 %v1004, 7
        %v1006 = vsub.s32 0, %v1005
        %v1007 = vrot.slane %v993, %v1006
        %v1008 = vlaneseq
        %v1009 = vshrl.u32 %v1008, 7
        %v1010 = vsub.s32 0, %v1009
        %v1011 = vrot.slane %v994, %v1010
        %v1012 = vlaneseq
        %v1013 = vshrl.u32 %v1012, 7
        %v1014 = vsub.s32 0, %v1013
        %v1015 = vrot.slane %v995, %v1014
        %v1016 = vmul.f32 %v998, %v1003
        %v1017 = vmul.f32 %v998, %v1007
        %v1018 = vmul.f32 %v998, %v1011
        %v1019 = vmul.f32 %v998, %v1015
        %v1020 = vadd.f32 %v957, %v1016
        %v1021 = vadd.f32 %v958, %v1017
        %v1022 = vadd.f32 %v959, %v1018
        %v1023 = vadd.f32 %v960, %v1019
        %1024 = vset.pattern.permute.xlu0 13
        %1025 = vperm.xlu0 %1024, %v302
        %v1026 = vpop.permute.xlu0 %1025
        %v1028 = vlaneseq
        %v1029 = vshrl.u32 %v1028, 7
        %v1030 = vsub.s32 0, %v1029
        %v1031 = vrot.slane %v260, %v1030
        %v1032 = vlaneseq
        %v1033 = vshrl.u32 %v1032, 7
        %v1034 = vsub.s32 0, %v1033
        %v1035 = vrot.slane %v264, %v1034
        %v1036 = vlaneseq
        %v1037 = vshrl.u32 %v1036, 7
        %v1038 = vsub.s32 0, %v1037
        %v1039 = vrot.slane %v268, %v1038
        %v1040 = vlaneseq
        %v1041 = vshrl.u32 %v1040, 7
        %v1042 = vsub.s32 0, %v1041
        %v1043 = vrot.slane %v272, %v1042
        %v1044 = vmul.f32 %v1026, %v1031
        %v1045 = vmul.f32 %v1026, %v1035
        %v1046 = vmul.f32 %v1026, %v1039
        %v1047 = vmul.f32 %v1026, %v1043
        %v1048 = vadd.f32 %v1020, %v1044
        %v1049 = vadd.f32 %v1021, %v1045
        %v1050 = vadd.f32 %v1022, %v1046
        %v1051 = vadd.f32 %v1023, %v1047
        %1052 = vrot.lane.b32.xlu0 %v260, 127
        %v1053 = vpop.permute.xlu0 %1052
        %1054 = vrot.lane.b32.xlu0 %v264, 127
        %v1055 = vpop.permute.xlu0 %1054
        %1056 = vrot.lane.b32.xlu0 %v268, 127
        %v1057 = vpop.permute.xlu0 %1056
        %1058 = vrot.lane.b32.xlu0 %v272, 127
        %v1059 = vpop.permute.xlu0 %1058
        %vm1060 = vcmp.lt.s32.totalorder %v286, 127
        %v1061 = vsel %vm1060, %v1057, %v1059
        %v1062 = vsel %vm1060, %v1055, %v1057
        %v1063 = vsel %vm1060, %v1053, %v1055
        %v1064 = vsel %vm1060, %v1059, %v1053
        %v1065 = vld [vmem:[#allocation5 + $0x10] sm:$0x88]
        %v1066 = vld [vmem:[#allocation5 + $0x18] sm:$0x88]
        %v1067 = vunpack.c.l.bf16 %v1065
        %v1068 = vunpack.c.h.bf16 %v1065
        %v1069 = vunpack.c.l.bf16 %v1066
        %v1070 = vunpack.c.h.bf16 %v1066
        %v1075 = vrot.slane %v1067, 6
        %v1076 = vrot.slane %v1068, 6
        %v1077 = vrot.slane %v1069, 6
        %v1078 = vrot.slane %v1070, 6
        %v1083 = vmul.f32 %v1063, %v1075
        %v1084 = vmul.f32 %v1062, %v1076
        %v1085 = vmul.f32 %v1061, %v1077
        %v1086 = vmul.f32 %v1064, %v1078
        %1087 = vset.pattern.permute.xlu0 14
        %1088 = vperm.xlu0 %1087, %v302
        %v1089 = vpop.permute.xlu0 %1088
        %v1091 = vlaneseq
        %v1092 = vshrl.u32 %v1091, 7
        %v1093 = vsub.s32 0, %v1092
        %v1094 = vrot.slane %v1083, %v1093
        %v1095 = vlaneseq
        %v1096 = vshrl.u32 %v1095, 7
        %v1097 = vsub.s32 0, %v1096
        %v1098 = vrot.slane %v1084, %v1097
        %v1099 = vlaneseq
        %v1100 = vshrl.u32 %v1099, 7
        %v1101 = vsub.s32 0, %v1100
        %v1102 = vrot.slane %v1085, %v1101
        %v1103 = vlaneseq
        %v1104 = vshrl.u32 %v1103, 7
        %v1105 = vsub.s32 0, %v1104
        %v1106 = vrot.slane %v1086, %v1105
        %v1107 = vmul.f32 %v1089, %v1094
        %v1108 = vmul.f32 %v1089, %v1098
        %v1109 = vmul.f32 %v1089, %v1102
        %v1110 = vmul.f32 %v1089, %v1106
        %v1111 = vadd.f32 %v1048, %v1107
        %v1112 = vadd.f32 %v1049, %v1108
        %v1113 = vadd.f32 %v1050, %v1109
        %v1114 = vadd.f32 %v1051, %v1110
        %1115 = vrot.lane.b32.xlu0 %v260, 121
        %v1116 = vpop.permute.xlu0 %1115
        %1117 = vrot.lane.b32.xlu0 %v264, 121
        %v1118 = vpop.permute.xlu0 %1117
        %1119 = vrot.lane.b32.xlu0 %v268, 121
        %v1120 = vpop.permute.xlu0 %1119
        %1121 = vrot.lane.b32.xlu0 %v272, 121
        %v1122 = vpop.permute.xlu0 %1121
        %vm1123 = vcmp.lt.s32.totalorder %v286, 121
        %v1124 = vsel %vm1123, %v1120, %v1122
        %v1125 = vsel %vm1123, %v1118, %v1120
        %v1126 = vsel %vm1123, %v1116, %v1118
        %v1127 = vsel %vm1123, %v1122, %v1116
        %v1128 = vrot.slane %v1067, 7
        %v1129 = vrot.slane %v1068, 7
        %v1130 = vrot.slane %v1069, 7
        %v1131 = vrot.slane %v1070, 7
        %v1136 = vmul.f32 %v1126, %v1128
        %v1137 = vmul.f32 %v1125, %v1129
        %v1138 = vmul.f32 %v1124, %v1130
        %v1139 = vmul.f32 %v1127, %v1131
        %1140 = vset.pattern.permute.xlu0 15
        %1141 = vperm.xlu0 %1140, %v302
        %v1142 = vpop.permute.xlu0 %1141
        %v1144 = vlaneseq
        %v1145 = vshrl.u32 %v1144, 7
        %v1146 = vsub.s32 0, %v1145
        %v1147 = vrot.slane %v1136, %v1146
        %v1148 = vlaneseq
        %v1149 = vshrl.u32 %v1148, 7
        %v1150 = vsub.s32 0, %v1149
        %v1151 = vrot.slane %v1137, %v1150
        %v1152 = vlaneseq
        %v1153 = vshrl.u32 %v1152, 7
        %v1154 = vsub.s32 0, %v1153
        %v1155 = vrot.slane %v1138, %v1154
        %v1156 = vlaneseq
        %v1157 = vshrl.u32 %v1156, 7
        %v1158 = vsub.s32 0, %v1157
        %v1159 = vrot.slane %v1139, %v1158
        %v1160 = vmul.f32 %v1142, %v1147
        %v1161 = vmul.f32 %v1142, %v1151
        %v1162 = vmul.f32 %v1142, %v1155
        %v1163 = vmul.f32 %v1142, %v1159
        %v1164 = vadd.f32 %v1111, %v1160
        %v1165 = vadd.f32 %v1112, %v1161
        %v1166 = vadd.f32 %v1113, %v1162
        %v1167 = vadd.f32 %v1114, %v1163
        %1168 = vrot.lane.b32.xlu0 %v260, 120
        %v1169 = vpop.permute.xlu0 %1168
        %1170 = vrot.lane.b32.xlu0 %v264, 120
        %v1171 = vpop.permute.xlu0 %1170
        %1172 = vrot.lane.b32.xlu0 %v268, 120
        %v1173 = vpop.permute.xlu0 %1172
        %1174 = vrot.lane.b32.xlu0 %v272, 120
        %v1175 = vpop.permute.xlu0 %1174
        %vm1176 = vcmp.lt.s32.totalorder %v286, 120
        %v1177 = vsel %vm1176, %v1173, %v1175
        %v1178 = vsel %vm1176, %v1171, %v1173
        %v1179 = vsel %vm1176, %v1169, %v1171
        %v1180 = vsel %vm1176, %v1175, %v1169
        %v1181 = vld [vmem:[#allocation5 + $0x20] sm:$0x11]
        %v1182 = vld [vmem:[#allocation5 + $0x28] sm:$0x11]
        %v1183 = vunpack.c.l.bf16 %v1181
        %v1184 = vunpack.c.h.bf16 %v1181
        %v1185 = vunpack.c.l.bf16 %v1182
        %v1186 = vunpack.c.h.bf16 %v1182
        %v1187 = vmul.f32 %v1179, %v1183
        %v1188 = vmul.f32 %v1178, %v1184
        %v1189 = vmul.f32 %v1177, %v1185
        %v1190 = vmul.f32 %v1180, %v1186
        %1191 = vset.pattern.permute.xlu0 16
        %1192 = vperm.xlu0 %1191, %v302
        %v1193 = vpop.permute.xlu0 %1192
        %v1195 = vlaneseq
        %v1196 = vshrl.u32 %v1195, 7
        %v1197 = vsub.s32 0, %v1196
        %v1198 = vrot.slane %v1187, %v1197
        %v1199 = vlaneseq
        %v1200 = vshrl.u32 %v1199, 7
        %v1201 = vsub.s32 0, %v1200
        %v1202 = vrot.slane %v1188, %v1201
        %v1203 = vlaneseq
        %v1204 = vshrl.u32 %v1203, 7
        %v1205 = vsub.s32 0, %v1204
        %v1206 = vrot.slane %v1189, %v1205
        %v1207 = vlaneseq
        %v1208 = vshrl.u32 %v1207, 7
        %v1209 = vsub.s32 0, %v1208
        %v1210 = vrot.slane %v1190, %v1209
        %v1211 = vmul.f32 %v1193, %v1198
        %v1212 = vmul.f32 %v1193, %v1202
        %v1213 = vmul.f32 %v1193, %v1206
        %v1214 = vmul.f32 %v1193, %v1210
        %v1215 = vadd.f32 %v1164, %v1211
        %v1216 = vadd.f32 %v1165, %v1212
        %v1217 = vadd.f32 %v1166, %v1213
        %v1218 = vadd.f32 %v1167, %v1214
        %1219 = vrot.lane.b32.xlu0 %v260, 119
        %v1220 = vpop.permute.xlu0 %1219
        %1221 = vrot.lane.b32.xlu0 %v264, 119
        %v1222 = vpop.permute.xlu0 %1221
        %1223 = vrot.lane.b32.xlu0 %v268, 119
        %v1224 = vpop.permute.xlu0 %1223
        %1225 = vrot.lane.b32.xlu0 %v272, 119
        %v1226 = vpop.permute.xlu0 %1225
        %vm1227 = vcmp.lt.s32.totalorder %v286, 119
        %v1228 = vsel %vm1227, %v1224, %v1226
        %v1229 = vsel %vm1227, %v1222, %v1224
        %v1230 = vsel %vm1227, %v1220, %v1222
        %v1231 = vsel %vm1227, %v1226, %v1220
        %v1236 = vrot.slane %v1183, 1
        %v1237 = vrot.slane %v1184, 1
        %v1238 = vrot.slane %v1185, 1
        %v1239 = vrot.slane %v1186, 1
        %v1244 = vmul.f32 %v1230, %v1236
        %v1245 = vmul.f32 %v1229, %v1237
        %v1246 = vmul.f32 %v1228, %v1238
        %v1247 = vmul.f32 %v1231, %v1239
        %1248 = vset.pattern.permute.xlu0 17
        %1249 = vperm.xlu0 %1248, %v302
        %v1250 = vpop.permute.xlu0 %1249
        %v1252 = vlaneseq
        %v1253 = vshrl.u32 %v1252, 7
        %v1254 = vsub.s32 0, %v1253
        %v1255 = vrot.slane %v1244, %v1254
        %v1256 = vlaneseq
        %v1257 = vshrl.u32 %v1256, 7
        %v1258 = vsub.s32 0, %v1257
        %v1259 = vrot.slane %v1245, %v1258
        %v1260 = vlaneseq
        %v1261 = vshrl.u32 %v1260, 7
        %v1262 = vsub.s32 0, %v1261
        %v1263 = vrot.slane %v1246, %v1262
        %v1264 = vlaneseq
        %v1265 = vshrl.u32 %v1264, 7
        %v1266 = vsub.s32 0, %v1265
        %v1267 = vrot.slane %v1247, %v1266
        %v1268 = vmul.f32 %v1250, %v1255
        %v1269 = vmul.f32 %v1250, %v1259
        %v1270 = vmul.f32 %v1250, %v1263
        %v1271 = vmul.f32 %v1250, %v1267
        %v1272 = vadd.f32 %v1215, %v1268
        %v1273 = vadd.f32 %v1216, %v1269
        %v1274 = vadd.f32 %v1217, %v1270
        %v1275 = vadd.f32 %v1218, %v1271
        %v1276 = vld [vmem:[#allocation5 + $0x20] sm:$0x22]
        %v1277 = vld [vmem:[#allocation5 + $0x28] sm:$0x22]
        %v1278 = vunpack.c.l.bf16 %v1276
        %v1279 = vunpack.c.h.bf16 %v1276
        %v1280 = vunpack.c.l.bf16 %v1277
        %v1281 = vunpack.c.h.bf16 %v1277
        %v1286 = vrot.slane %v1278, 2
        %v1287 = vrot.slane %v1279, 2
        %v1288 = vrot.slane %v1280, 2
        %v1289 = vrot.slane %v1281, 2
        %v1294 = vmul.f32 %v290, %v1286
        %v1295 = vmul.f32 %v289, %v1287
        %v1296 = vmul.f32 %v288, %v1288
        %v1297 = vmul.f32 %v291, %v1289
        %1298 = vset.pattern.permute.xlu0 18
        %1299 = vperm.xlu0 %1298, %v302
        %v1300 = vpop.permute.xlu0 %1299
        %v1302 = vlaneseq
        %v1303 = vshrl.u32 %v1302, 7
        %v1304 = vsub.s32 0, %v1303
        %v1305 = vrot.slane %v1294, %v1304
        %v1306 = vlaneseq
        %v1307 = vshrl.u32 %v1306, 7
        %v1308 = vsub.s32 0, %v1307
        %v1309 = vrot.slane %v1295, %v1308
        %v1310 = vlaneseq
        %v1311 = vshrl.u32 %v1310, 7
        %v1312 = vsub.s32 0, %v1311
        %v1313 = vrot.slane %v1296, %v1312
        %v1314 = vlaneseq
        %v1315 = vshrl.u32 %v1314, 7
        %v1316 = vsub.s32 0, %v1315
        %v1317 = vrot.slane %v1297, %v1316
        %v1318 = vmul.f32 %v1300, %v1305
        %v1319 = vmul.f32 %v1300, %v1309
        %v1320 = vmul.f32 %v1300, %v1313
        %v1321 = vmul.f32 %v1300, %v1317
        %v1322 = vadd.f32 %v1272, %v1318
        %v1323 = vadd.f32 %v1273, %v1319
        %v1324 = vadd.f32 %v1274, %v1320
        %v1325 = vadd.f32 %v1275, %v1321
        %v1326 = vrot.slane %v1278, 3
        %v1327 = vrot.slane %v1279, 3
        %v1328 = vrot.slane %v1280, 3
        %v1329 = vrot.slane %v1281, 3
        %v1334 = vmul.f32 %v343, %v1326
        %v1335 = vmul.f32 %v342, %v1327
        %v1336 = vmul.f32 %v341, %v1328
        %v1337 = vmul.f32 %v344, %v1329
        %1338 = vset.pattern.permute.xlu0 19
        %1339 = vperm.xlu0 %1338, %v302
        %v1340 = vpop.permute.xlu0 %1339
        %v1342 = vlaneseq
        %v1343 = vshrl.u32 %v1342, 7
        %v1344 = vsub.s32 0, %v1343
        %v1345 = vrot.slane %v1334, %v1344
        %v1346 = vlaneseq
        %v1347 = vshrl.u32 %v1346, 7
        %v1348 = vsub.s32 0, %v1347
        %v1349 = vrot.slane %v1335, %v1348
        %v1350 = vlaneseq
        %v1351 = vshrl.u32 %v1350, 7
        %v1352 = vsub.s32 0, %v1351
        %v1353 = vrot.slane %v1336, %v1352
        %v1354 = vlaneseq
        %v1355 = vshrl.u32 %v1354, 7
        %v1356 = vsub.s32 0, %v1355
        %v1357 = vrot.slane %v1337, %v1356
        %v1358 = vmul.f32 %v1340, %v1345
        %v1359 = vmul.f32 %v1340, %v1349
        %v1360 = vmul.f32 %v1340, %v1353
        %v1361 = vmul.f32 %v1340, %v1357
        %v1362 = vadd.f32 %v1322, %v1358
        %v1363 = vadd.f32 %v1323, %v1359
        %v1364 = vadd.f32 %v1324, %v1360
        %v1365 = vadd.f32 %v1325, %v1361
        %v1366 = vld [vmem:[#allocation5 + $0x20] sm:$0x44]
        %v1367 = vld [vmem:[#allocation5 + $0x28] sm:$0x44]
        %v1368 = vunpack.c.l.bf16 %v1366
        %v1369 = vunpack.c.h.bf16 %v1366
        %v1370 = vunpack.c.l.bf16 %v1367
        %v1371 = vunpack.c.h.bf16 %v1367
        %v1376 = vrot.slane %v1368, 4
        %v1377 = vrot.slane %v1369, 4
        %v1378 = vrot.slane %v1370, 4
        %v1379 = vrot.slane %v1371, 4
        %v1384 = vmul.f32 %v400, %v1376
        %v1385 = vmul.f32 %v399, %v1377
        %v1386 = vmul.f32 %v398, %v1378
        %v1387 = vmul.f32 %v401, %v1379
        %1388 = vset.pattern.permute.xlu0 20
        %1389 = vperm.xlu0 %1388, %v302
        %v1390 = vpop.permute.xlu0 %1389
        %v1392 = vlaneseq
        %v1393 = vshrl.u32 %v1392, 7
        %v1394 = vsub.s32 0, %v1393
        %v1395 = vrot.slane %v1384, %v1394
        %v1396 = vlaneseq
        %v1397 = vshrl.u32 %v1396, 7
        %v1398 = vsub.s32 0, %v1397
        %v1399 = vrot.slane %v1385, %v1398
        %v1400 = vlaneseq
        %v1401 = vshrl.u32 %v1400, 7
        %v1402 = vsub.s32 0, %v1401
        %v1403 = vrot.slane %v1386, %v1402
        %v1404 = vlaneseq
        %v1405 = vshrl.u32 %v1404, 7
        %v1406 = vsub.s32 0, %v1405
        %v1407 = vrot.slane %v1387, %v1406
        %v1408 = vmul.f32 %v1390, %v1395
        %v1409 = vmul.f32 %v1390, %v1399
        %v1410 = vmul.f32 %v1390, %v1403
        %v1411 = vmul.f32 %v1390, %v1407
        %v1412 = vadd.f32 %v1362, %v1408
        %v1413 = vadd.f32 %v1363, %v1409
        %v1414 = vadd.f32 %v1364, %v1410
        %v1415 = vadd.f32 %v1365, %v1411
        %v1416 = vrot.slane %v1368, 5
        %v1417 = vrot.slane %v1369, 5
        %v1418 = vrot.slane %v1370, 5
        %v1419 = vrot.slane %v1371, 5
        %v1424 = vmul.f32 %v463, %v1416
        %v1425 = vmul.f32 %v462, %v1417
        %v1426 = vmul.f32 %v461, %v1418
        %v1427 = vmul.f32 %v464, %v1419
        %1428 = vset.pattern.permute.xlu0 21
        %1429 = vperm.xlu0 %1428, %v302
        %v1430 = vpop.permute.xlu0 %1429
        %v1432 = vlaneseq
        %v1433 = vshrl.u32 %v1432, 7
        %v1434 = vsub.s32 0, %v1433
        %v1435 = vrot.slane %v1424, %v1434
        %v1436 = vlaneseq
        %v1437 = vshrl.u32 %v1436, 7
        %v1438 = vsub.s32 0, %v1437
        %v1439 = vrot.slane %v1425, %v1438
        %v1440 = vlaneseq
        %v1441 = vshrl.u32 %v1440, 7
        %v1442 = vsub.s32 0, %v1441
        %v1443 = vrot.slane %v1426, %v1442
        %v1444 = vlaneseq
        %v1445 = vshrl.u32 %v1444, 7
        %v1446 = vsub.s32 0, %v1445
        %v1447 = vrot.slane %v1427, %v1446
        %v1448 = vmul.f32 %v1430, %v1435
        %v1449 = vmul.f32 %v1430, %v1439
        %v1450 = vmul.f32 %v1430, %v1443
        %v1451 = vmul.f32 %v1430, %v1447
        %v1452 = vadd.f32 %v1412, %v1448
        %v1453 = vadd.f32 %v1413, %v1449
        %v1454 = vadd.f32 %v1414, %v1450
        %v1455 = vadd.f32 %v1415, %v1451
        %v1456 = vld [vmem:[#allocation5 + $0x20] sm:$0x88]
        %v1457 = vld [vmem:[#allocation5 + $0x28] sm:$0x88]
        %v1458 = vunpack.c.l.bf16 %v1456
        %v1459 = vunpack.c.h.bf16 %v1456
        %v1460 = vunpack.c.l.bf16 %v1457
        %v1461 = vunpack.c.h.bf16 %v1457
        %v1466 = vrot.slane %v1458, 6
        %v1467 = vrot.slane %v1459, 6
        %v1468 = vrot.slane %v1460, 6
        %v1469 = vrot.slane %v1461, 6
        %v1474 = vmul.f32 %v516, %v1466
        %v1475 = vmul.f32 %v515, %v1467
        %v1476 = vmul.f32 %v514, %v1468
        %v1477 = vmul.f32 %v517, %v1469
        %1478 = vset.pattern.permute.xlu0 22
        %1479 = vperm.xlu0 %1478, %v302
        %v1480 = vpop.permute.xlu0 %1479
        %v1482 = vlaneseq
        %v1483 = vshrl.u32 %v1482, 7
        %v1484 = vsub.s32 0, %v1483
        %v1485 = vrot.slane %v1474, %v1484
        %v1486 = vlaneseq
        %v1487 = vshrl.u32 %v1486, 7
        %v1488 = vsub.s32 0, %v1487
        %v1489 = vrot.slane %v1475, %v1488
        %v1490 = vlaneseq
        %v1491 = vshrl.u32 %v1490, 7
        %v1492 = vsub.s32 0, %v1491
        %v1493 = vrot.slane %v1476, %v1492
        %v1494 = vlaneseq
        %v1495 = vshrl.u32 %v1494, 7
        %v1496 = vsub.s32 0, %v1495
        %v1497 = vrot.slane %v1477, %v1496
        %v1498 = vmul.f32 %v1480, %v1485
        %v1499 = vmul.f32 %v1480, %v1489
        %v1500 = vmul.f32 %v1480, %v1493
        %v1501 = vmul.f32 %v1480, %v1497
        %v1502 = vadd.f32 %v1452, %v1498
        %v1503 = vadd.f32 %v1453, %v1499
        %v1504 = vadd.f32 %v1454, %v1500
        %v1505 = vadd.f32 %v1455, %v1501
        %v1506 = vrot.slane %v1458, 7
        %v1507 = vrot.slane %v1459, 7
        %v1508 = vrot.slane %v1460, 7
        %v1509 = vrot.slane %v1461, 7
        %v1514 = vmul.f32 %v579, %v1506
        %v1515 = vmul.f32 %v578, %v1507
        %v1516 = vmul.f32 %v577, %v1508
        %v1517 = vmul.f32 %v580, %v1509
        %1518 = vset.pattern.permute.xlu0 23
        %1519 = vperm.xlu0 %1518, %v302
        %v1520 = vpop.permute.xlu0 %1519
        %v1522 = vlaneseq
        %v1523 = vshrl.u32 %v1522, 7
        %v1524 = vsub.s32 0, %v1523
        %v1525 = vrot.slane %v1514, %v1524
        %v1526 = vlaneseq
        %v1527 = vshrl.u32 %v1526, 7
        %v1528 = vsub.s32 0, %v1527
        %v1529 = vrot.slane %v1515, %v1528
        %v1530 = vlaneseq
        %v1531 = vshrl.u32 %v1530, 7
        %v1532 = vsub.s32 0, %v1531
        %v1533 = vrot.slane %v1516, %v1532
        %v1534 = vlaneseq
        %v1535 = vshrl.u32 %v1534, 7
        %v1536 = vsub.s32 0, %v1535
        %v1537 = vrot.slane %v1517, %v1536
        %v1538 = vmul.f32 %v1520, %v1525
        %v1539 = vmul.f32 %v1520, %v1529
        %v1540 = vmul.f32 %v1520, %v1533
        %v1541 = vmul.f32 %v1520, %v1537
        %v1542 = vadd.f32 %v1502, %v1538
        %v1543 = vadd.f32 %v1503, %v1539
        %v1544 = vadd.f32 %v1504, %v1540
        %v1545 = vadd.f32 %v1505, %v1541
        %v1546 = vld [vmem:[#allocation5 + $0x30] sm:$0x11]
        %v1547 = vld [vmem:[#allocation5 + $0x38] sm:$0x11]
        %v1548 = vunpack.c.l.bf16 %v1546
        %v1549 = vunpack.c.h.bf16 %v1546
        %v1550 = vunpack.c.l.bf16 %v1547
        %v1551 = vunpack.c.h.bf16 %v1547
        %v1552 = vmul.f32 %v632, %v1548
        %v1553 = vmul.f32 %v631, %v1549
        %v1554 = vmul.f32 %v630, %v1550
        %v1555 = vmul.f32 %v633, %v1551
        %1556 = vset.pattern.permute.xlu0 24
        %1557 = vperm.xlu0 %1556, %v302
        %v1558 = vpop.permute.xlu0 %1557
        %v1560 = vlaneseq
        %v1561 = vshrl.u32 %v1560, 7
        %v1562 = vsub.s32 0, %v1561
        %v1563 = vrot.slane %v1552, %v1562
        %v1564 = vlaneseq
        %v1565 = vshrl.u32 %v1564, 7
        %v1566 = vsub.s32 0, %v1565
        %v1567 = vrot.slane %v1553, %v1566
        %v1568 = vlaneseq
        %v1569 = vshrl.u32 %v1568, 7
        %v1570 = vsub.s32 0, %v1569
        %v1571 = vrot.slane %v1554, %v1570
        %v1572 = vlaneseq
        %v1573 = vshrl.u32 %v1572, 7
        %v1574 = vsub.s32 0, %v1573
        %v1575 = vrot.slane %v1555, %v1574
        %v1576 = vmul.f32 %v1558, %v1563
        %v1577 = vmul.f32 %v1558, %v1567
        %v1578 = vmul.f32 %v1558, %v1571
        %v1579 = vmul.f32 %v1558, %v1575
        %v1580 = vadd.f32 %v1542, %v1576
        %v1581 = vadd.f32 %v1543, %v1577
        %v1582 = vadd.f32 %v1544, %v1578
        %v1583 = vadd.f32 %v1545, %v1579
        %v1588 = vrot.slane %v1548, 1
        %v1589 = vrot.slane %v1549, 1
        %v1590 = vrot.slane %v1550, 1
        %v1591 = vrot.slane %v1551, 1
        %v1596 = vmul.f32 %v695, %v1588
        %v1597 = vmul.f32 %v694, %v1589
        %v1598 = vmul.f32 %v693, %v1590
        %v1599 = vmul.f32 %v696, %v1591
        %1600 = vset.pattern.permute.xlu0 25
        %1601 = vperm.xlu0 %1600, %v302
        %v1602 = vpop.permute.xlu0 %1601
        %v1604 = vlaneseq
        %v1605 = vshrl.u32 %v1604, 7
        %v1606 = vsub.s32 0, %v1605
        %v1607 = vrot.slane %v1596, %v1606
        %v1608 = vlaneseq
        %v1609 = vshrl.u32 %v1608, 7
        %v1610 = vsub.s32 0, %v1609
        %v1611 = vrot.slane %v1597, %v1610
        %v1612 = vlaneseq
        %v1613 = vshrl.u32 %v1612, 7
        %v1614 = vsub.s32 0, %v1613
        %v1615 = vrot.slane %v1598, %v1614
        %v1616 = vlaneseq
        %v1617 = vshrl.u32 %v1616, 7
        %v1618 = vsub.s32 0, %v1617
        %v1619 = vrot.slane %v1599, %v1618
        %v1620 = vmul.f32 %v1602, %v1607
        %v1621 = vmul.f32 %v1602, %v1611
        %v1622 = vmul.f32 %v1602, %v1615
        %v1623 = vmul.f32 %v1602, %v1619
        %v1624 = vadd.f32 %v1580, %v1620
        %v1625 = vadd.f32 %v1581, %v1621
        %v1626 = vadd.f32 %v1582, %v1622
        %v1627 = vadd.f32 %v1583, %v1623
        %v1628 = vld [vmem:[#allocation5 + $0x30] sm:$0x22]
        %v1629 = vld [vmem:[#allocation5 + $0x38] sm:$0x22]
        %v1630 = vunpack.c.l.bf16 %v1628
        %v1631 = vunpack.c.h.bf16 %v1628
        %v1632 = vunpack.c.l.bf16 %v1629
        %v1633 = vunpack.c.h.bf16 %v1629
        %v1638 = vrot.slane %v1630, 2
        %v1639 = vrot.slane %v1631, 2
        %v1640 = vrot.slane %v1632, 2
        %v1641 = vrot.slane %v1633, 2
        %v1646 = vmul.f32 %v748, %v1638
        %v1647 = vmul.f32 %v747, %v1639
        %v1648 = vmul.f32 %v746, %v1640
        %v1649 = vmul.f32 %v749, %v1641
        %1650 = vset.pattern.permute.xlu0 26
        %1651 = vperm.xlu0 %1650, %v302
        %v1652 = vpop.permute.xlu0 %1651
        %v1654 = vlaneseq
        %v1655 = vshrl.u32 %v1654, 7
        %v1656 = vsub.s32 0, %v1655
        %v1657 = vrot.slane %v1646, %v1656
        %v1658 = vlaneseq
        %v1659 = vshrl.u32 %v1658, 7
        %v1660 = vsub.s32 0, %v1659
        %v1661 = vrot.slane %v1647, %v1660
        %v1662 = vlaneseq
        %v1663 = vshrl.u32 %v1662, 7
        %v1664 = vsub.s32 0, %v1663
        %v1665 = vrot.slane %v1648, %v1664
        %v1666 = vlaneseq
        %v1667 = vshrl.u32 %v1666, 7
        %v1668 = vsub.s32 0, %v1667
        %v1669 = vrot.slane %v1649, %v1668
        %v1670 = vmul.f32 %v1652, %v1657
        %v1671 = vmul.f32 %v1652, %v1661
        %v1672 = vmul.f32 %v1652, %v1665
        %v1673 = vmul.f32 %v1652, %v1669
        %v1674 = vadd.f32 %v1624, %v1670
        %v1675 = vadd.f32 %v1625, %v1671
        %v1676 = vadd.f32 %v1626, %v1672
        %v1677 = vadd.f32 %v1627, %v1673
        %v1678 = vld [vmem:[#allocation8] sm:$0xff]
        %1680 = vset.pattern.permute.xlu0 0
        %1681 = vperm.xlu0 %1680, %v1678
        %v1682 = vpop.permute.xlu0 %1681
        %v1684 = vadd.f32 %v1674, %v1682
        %v1685 = vadd.f32 %v1675, %v1682
        %v1686 = vadd.f32 %v1676, %v1682
        %v1687 = vadd.f32 %v1677, %v1682
        %v1688 = vmax.f32 %v1684, 0.0
        %v1689 = vmax.f32 %v1685, 0.0
        %v1690 = vmax.f32 %v1686, 0.0
        %v1691 = vmax.f32 %v1687, 0.0
        %v1692 = vpack.c.bf16 %v1688, %v1688
        %v1693 = vpack.c.bf16 %v1689, %v1689
        %v1694 = vpack.c.bf16 %v1690, %v1690
        %v1695 = vpack.c.bf16 %v1691, %v1691
        %v1700 = vunpack.c.l.b16 %v1692
        %v1701 = vunpack.c.l.b16 %v1693
        %v1702 = vunpack.c.l.b16 %v1694
        %v1703 = vunpack.c.l.b16 %v1695
        %v1704 = vpack.c.b16 %v1701, %v1700
        %v1705 = vpack.c.b16 %v1703, %v1702
        %1708 = vst [vmem:[%s253] sm:$0xff] %v1704
        %1709 = vst [vmem:[%s253 + $0x8] sm:$0xff] %v1705
        %s1710 = sand.u32 %s120, 1
        %s1711 = scalar_lea.sflag [#allocation4], %s1710
        %s1712 = sand.u32 %s120, 1
        %s1713 = smul.addr %s1712, 16
        %s1714 = scalar_lea.vmem [#allocation10], %s1713
        // Predicated region
        $region53: #{tpu_custom_call.1} parent=35 // pred_check
          %p1715 = pneg %p130
        $region54: #{tpu_custom_call.1} parent=35 // pred_check_branch
          %1717 = sbr.rel (%p1715) target = $region56
        $region55: #{tpu_custom_call.1} parent=35 // pred_region
          %s1719 = ssub.s32 256, 256
          %1720 = vsyncadd %s1711, %s1719
          %s1721 = smul.addr %s23, 4
          %s1722 = smul.addr %s1721, 64
          %s1723 = scalar_lea.hbm %s4, %s1722
          %s1725 = sshll.u32 %s1714, 4
          %s1726 = int_to_ptr.vmem [resolvable:$true] %s1725
          %1728 = dma.vmem_to_hbm [thread:$0]  %s1726, 256, %s1723, %s1711
        $region56: #{tpu_custom_call.1} parent=35 // pred_fallthru
          _
      $region36: #{tpu_custom_call.1} parent=5 // pred_fallthru
        _
      %p1729 = scmp.le.s32.totalorder 2, %s18
      // Predicated region
      $region57: #{tpu_custom_call.1} parent=5 // pred_check
        %p1730 = pneg %p1729
      $region58: #{tpu_custom_call.1} parent=5 // pred_check_branch
        %1732 = sbr.rel (%p1730) target = $region60
      $region59: #{tpu_custom_call.1} parent=5 // pred_region
        %s1733 = ssub.s32 %s18, 2
        // Predicated region
        $region61: #{tpu_custom_call.1} parent=59 // pred_check
          %p1734 = pneg %p136
        $region62: #{tpu_custom_call.1} parent=59 // pred_check_branch
          %1736 = sbr.rel (%p1734) target = $region64
        $region63: #{tpu_custom_call.1} parent=59 // pred_region
          %s1737 = sand.u32 %s121, 1
          %s1738 = scalar_lea.sflag [#allocation4], %s1737
          %s1739 = sand.u32 %s121, 1
          %s1740 = smul.addr %s1739, 16
          %s1741 = scalar_lea.vmem [#allocation10], %s1740
          %1742 = dma.done %s1738, 256
        $region64: #{tpu_custom_call.1} parent=59 // pred_fallthru
          _
      $region60: #{tpu_custom_call.1} parent=5 // pred_fallthru
        _
    $region6: #{tpu_custom_call.1} parent=1 // loop_footer
      %s22 = sadd.s32 1, %s18
    $region7: #{tpu_custom_call.1} parent=1 // loop_footer_branch
      %17 = sbr.rel target = $region3
    $region8: #{tpu_custom_call.1} parent=1 // loop_exit
      _
    %1743 = vsyncpa [#allocation3], 1
    %s1744 = scalar_lea.sflag [#allocation3], 1
    %1745 = vsyncpa %s1744, 1
    %1746 = vsyncpa [#allocation6], 1
    %1747 = vsyncpa [#allocation9], 1
    %1748 = vsyncpa [#allocation4], 1
    %s1749 = scalar_lea.sflag [#allocation4], 1
    %1750 = vsyncpa %s1749, 1

</llo_original>
